<compile_context>
chip_gen: v7x
topology: tpu7x:2x2x1
jax: 0.10.0
libtpu: 0.0.40
codegen_flags: <defaults>
</compile_context>

<pallas_src>
import jax
import jax.numpy as jnp
from jax.experimental import pallas as pl
from jax.experimental.pallas import tpu as pltpu


def _round_up(x, m):
    return (x + m - 1) // m * m


# ---------------------------------------------------------------------------
# In-kernel helper: Conv1d(k=2, padding='same') [+ReLU] + MaxPool1d(2, 2).
# h is time-major flattened: row = t * bb + b  (bb = batch block).
# ---------------------------------------------------------------------------
def _conv_relu_pool(h, wa, wb, bias, bb, *, relu):
    M, Cin = h.shape
    L = M // bb
    # Tap B reads x[t+1]; PyTorch 'same' padding for k=2 right-pads one zero,
    # so the last time band reads zeros.  In this layout that is a
    # tile-aligned row shift by bb rows plus one zero band.
    hb = jnp.concatenate(
        [h[bb:, :], jnp.zeros((bb, Cin), jnp.float32)], axis=0)
    y = (jnp.dot(h, wa, preferred_element_type=jnp.float32)
         + jnp.dot(hb, wb, preferred_element_type=jnp.float32)
         + bias)
    if relu:
        y = jnp.maximum(y, 0.0)
    # MaxPool1d(kernel=2, stride=2) along time: time steps 2u / 2u+1 occupy
    # adjacent, tile-aligned bb-row bands.  Reshape splits rows at multiples
    # of 2*bb (a multiple of 8) and the sublane slice at bb is also aligned,
    # so this is pure VPU work with no relayout and no MXU.
    Cout = y.shape[1]
    y3 = y.reshape(L // 2, 2 * bb, Cout)
    pooled = jnp.maximum(y3[:, :bb, :], y3[:, bb:, :])
    return pooled.reshape((L // 2) * bb, Cout)


# ---------------------------------------------------------------------------
# The Pallas kernel: full CNN1D forward for one batch block.
# ---------------------------------------------------------------------------
def cnn1d_kernel(x_ref,
                 w1a, w1b, b1, w2a, w2b, b2, w3a, w3b, b3, w4a, w4b, b4,
                 wl1, bl1, wl2, bl2, wl3, bl3,
                 out_ref):
    bb = out_ref.shape[0]                                     # batch block

    h = x_ref[...].astype(jnp.float32)                        # (L*bb, C0)
    h = _conv_relu_pool(h, w1a[...], w1b[...], b1[...], bb, relu=True)
    h = _conv_relu_pool(h, w2a[...], w2b[...], b2[...], bb, relu=True)
    h = _conv_relu_pool(h, w3a[...], w3b[...], b3[...], bb, relu=True)
    # Last conv block has NO ReLU in the reference module.
    h = _conv_relu_pool(h, w4a[...], w4b[...], b4[...], bb, relu=False)  # (T*bb, C4)

    # Regression head.  PyTorch flattens conv_out channel-major (c*T + t);
    # that ordering is folded into wl1 (shape (T, C4, H1)) by the wrapper, so
    # Linear1 = sum over T per-time-step (bb, C4) @ (C4, H1) matmuls.
    T = wl1.shape[0]
    z1 = bl1[...]                                             # (1, H1)
    for t in range(T):                                        # static, tiny T
        z1 = z1 + jnp.dot(h[t * bb:(t + 1) * bb, :], wl1[t],
                          preferred_element_type=jnp.float32)
    # Sequential(Linear1, Linear2, ReLU, Linear3): ReLU only after Linear2.
    z2 = jnp.maximum(
        jnp.dot(z1, wl2[...], preferred_element_type=jnp.float32) + bl2[...],
        0.0)
    z3 = jnp.dot(z2, wl3[...], preferred_element_type=jnp.float32) + bl3[...]
    out_ref[...] = z3.astype(out_ref.dtype)                   # (bb, 1)


# ---------------------------------------------------------------------------
# Wrapper: batch-block grid, time-major input layout, BlockSpecs.
# ---------------------------------------------------------------------------
def cnn1d_forward(x, p, *, block_b=128):
    """x: (B, window_size, sensor_num) -- the layout PyTorch receives before
    its internal permute(0, 2, 1)."""
    B, L, C0 = x.shape
    assert L % 16 == 0, "window_size must be a multiple of 16"

    bb = block_b if B >= block_b else _round_up(B, 8)
    Bpad = _round_up(B, bb)
    nb = Bpad // bb
    if Bpad != B:
        x = jnp.concatenate(
            [x, jnp.zeros((Bpad - B, L, C0), x.dtype)], axis=0)

    # Per-block time-major layout: inside block i, row = t * bb + b.  This is
    # the analogue of (and no more expensive than) PyTorch's own permute.
    x_tm = (x.reshape(nb, bb, L, C0)
             .transpose(0, 2, 1, 3)
             .reshape(nb * L * bb, C0))

    weights = [p['w1a'], p['w1b'], p['b1'],
               p['w2a'], p['w2b'], p['b2'],
               p['w3a'], p['w3b'], p['b3'],
               p['w4a'], p['w4b'], p['b4'],
               p['wl1p'], p['bl1'], p['wl2'], p['bl2'], p['wl3'], p['bl3']]

    def full_spec(a):
        # Constant index map -> the pipeline keeps the block resident.
        return pl.BlockSpec(a.shape, lambda i, nd=a.ndim: (0,) * nd)

    in_specs = [pl.BlockSpec((L * bb, C0), lambda i: (i, 0))]
    in_specs += [full_spec(w) for w in weights]

    out = pl.pallas_call(
        cnn1d_kernel,
        out_shape=jax.ShapeDtypeStruct((Bpad, 1), jnp.float32),
        grid_spec=pltpu.PrefetchScalarGridSpec(
            num_scalar_prefetch=0,
            grid=(nb,),
            in_specs=in_specs,
            out_specs=pl.BlockSpec((bb, 1), lambda i: (i, 0)),
        ),
        compiler_params=pltpu.CompilerParams(
            dimension_semantics=("parallel",),
            vmem_limit_bytes=32 * 1024 * 1024),
    )(x_tm, *weights)
    return out[:B, 0]                                          # (B,)


# ---------------------------------------------------------------------------
# Deterministic synthetic parameters (shapes follow CNN1D.__init__).
# ---------------------------------------------------------------------------
def init_params(key, window_size, sensor_num, h1=256, h2=32):
    C0 = sensor_num
    C1, C2, C3, C4 = C0 * 2, C0 * 4, C0 * 8, C0 * 16
    T = window_size // 16
    F = sensor_num * window_size            # = C4 * T
    ks = jax.random.split(key, 20)

    def u(k, shape, fan_in):
        bound = 1.0 / jnp.sqrt(jnp.float32(fan_in))
        return jax.random.uniform(k, shape, jnp.float32, -bound, bound)

    p = {}
    # Conv1d weights stored as two taps of shape (Cin, Cout): tap0 = w[:,:,0].
    p['w1a'], p['w1b'], p['b1'] = u(ks[0], (C0, C1), 2 * C0), u(ks[1], (C0, C1), 2 * C0), u(ks[2], (1, C1), 2 * C0)
    p['w2a'], p['w2b'], p['b2'] = u(ks[3], (C1, C2), 2 * C1), u(ks[4], (C1, C2), 2 * C1), u(ks[5], (1, C2), 2 * C1)
    p['w3a'], p['w3b'], p['b3'] = u(ks[6], (C2, C3), 2 * C2), u(ks[7], (C2, C3), 2 * C2), u(ks[8], (1, C3), 2 * C2)
    p['w4a'], p['w4b'], p['b4'] = u(ks[9], (C3, C4), 2 * C3), u(ks[10], (C3, C4), 2 * C3), u(ks[11], (1, C4), 2 * C3)
    # Linear weights stored (in, out).  wl1 row index follows the PyTorch
    # flatten order (c * T + t).
    p['wl1'], p['bl1'] = u(ks[12], (F, h1), F), u(ks[13], (1, h1), F)
    p['wl2'], p['bl2'] = u(ks[14], (h1, h2), h1), u(ks[15], (1, h2), h1)
    p['wl3'], p['bl3'] = u(ks[16], (h2, 1), h2), u(ks[17], (1, 1), h2)
    # Permute wl1 rows so the kernel can consume the (time, channel) layout:
    # wl1p[t, c, :] == wl1[c * T + t, :]
    p['wl1p'] = jnp.transpose(p['wl1'].reshape(C4, T, h1), (1, 0, 2))
    return p


# ---------------------------------------------------------------------------
# Pure-JAX reference (mirrors the PyTorch forward exactly) for validation.
# ---------------------------------------------------------------------------
def ref_forward(x, p):
    h = x.astype(jnp.float32)                                  # (B, L, C0)
    layers = [(p['w1a'], p['w1b'], p['b1'], True),
              (p['w2a'], p['w2b'], p['b2'], True),
              (p['w3a'], p['w3b'], p['b3'], True),
              (p['w4a'], p['w4b'], p['b4'], False)]
    for wa, wb, b, relu in layers:
        hs = jnp.concatenate([h[:, 1:, :], jnp.zeros_like(h[:, :1, :])], axis=1)
        y = jnp.einsum('blc,cd->bld', h, wa) + jnp.einsum('blc,cd->bld', hs, wb) + b
        if relu:
            y = jnp.maximum(y, 0.0)
        B, L, C = y.shape
        h = jnp.max(y.reshape(B, L // 2, 2, C), axis=2)
    B, T, C = h.shape
    feat = jnp.transpose(h, (0, 2, 1)).reshape(B, C * T)   # PyTorch .view flatten order
    z1 = feat @ p['wl1'] + p['bl1']
    z2 = jnp.maximum(z1 @ p['wl2'] + p['bl2'], 0.0)
    z3 = z2 @ p['wl3'] + p['bl3']
    return z3[:, 0]


if __name__ == "__main__":
    window_size, sensor_num, batch = 32, 4, 2
    key = jax.random.PRNGKey(0)
    kx, kp = jax.random.split(key)
    x = jax.random.normal(kx, (batch, window_size, sensor_num), jnp.float32)
    params = init_params(kp, window_size, sensor_num)

    out = cnn1d_forward(x, params)
    out = jax.block_until_ready(out)

    ref = ref_forward(x, params)
    assert out.shape == (batch,), out.shape
    if not jnp.allclose(out, ref, atol=1e-4, rtol=1e-4):
        raise AssertionError(f"mismatch: kernel={out} ref={ref}")
    print("KERNEL_OK")
</pallas_src>

<mosaic_0001>
module attributes {stable_mosaic.version = 11 : i64} {
  func.func @cnn1d_kernel(%arg0: i32, %arg1: memref<256x4xf32, #tpu.memory_space<vmem>>, %arg2: memref<4x8xf32, #tpu.memory_space<vmem>>, %arg3: memref<4x8xf32, #tpu.memory_space<vmem>>, %arg4: memref<1x8xf32, #tpu.memory_space<vmem>>, %arg5: memref<8x16xf32, #tpu.memory_space<vmem>>, %arg6: memref<8x16xf32, #tpu.memory_space<vmem>>, %arg7: memref<1x16xf32, #tpu.memory_space<vmem>>, %arg8: memref<16x32xf32, #tpu.memory_space<vmem>>, %arg9: memref<16x32xf32, #tpu.memory_space<vmem>>, %arg10: memref<1x32xf32, #tpu.memory_space<vmem>>, %arg11: memref<32x64xf32, #tpu.memory_space<vmem>>, %arg12: memref<32x64xf32, #tpu.memory_space<vmem>>, %arg13: memref<1x64xf32, #tpu.memory_space<vmem>>, %arg14: memref<2x64x256xf32, #tpu.memory_space<vmem>>, %arg15: memref<1x256xf32, #tpu.memory_space<vmem>>, %arg16: memref<256x32xf32, #tpu.memory_space<vmem>>, %arg17: memref<1x32xf32, #tpu.memory_space<vmem>>, %arg18: memref<32x1xf32, #tpu.memory_space<vmem>>, %arg19: memref<1x1xf32, #tpu.memory_space<vmem>>, %arg20: memref<8x1xf32, #tpu.memory_space<vmem>>) attributes {dimension_semantics = [#tpu.dimension_semantics<parallel>], iteration_bounds = array<i64: 1>, scalar_prefetch = 0 : i64, scratch_operands = 0 : i64, tpu.core_type = #tpu.core_type<tc>, window_params = [{transform_indices = @transform_0, window_bounds = array<i64: 256, 4>}, {pipeline_mode = #tpu.pipeline_mode<synchronous>, transform_indices = @transform_1, window_bounds = array<i64: 4, 8>}, {pipeline_mode = #tpu.pipeline_mode<synchronous>, transform_indices = @transform_2, window_bounds = array<i64: 4, 8>}, {pipeline_mode = #tpu.pipeline_mode<synchronous>, transform_indices = @transform_3, window_bounds = array<i64: 1, 8>}, {pipeline_mode = #tpu.pipeline_mode<synchronous>, transform_indices = @transform_4, window_bounds = array<i64: 8, 16>}, {pipeline_mode = #tpu.pipeline_mode<synchronous>, transform_indices = @transform_5, window_bounds = array<i64: 8, 16>}, {pipeline_mode = #tpu.pipeline_mode<synchronous>, transform_indices = @transform_6, window_bounds = array<i64: 1, 16>}, {pipeline_mode = #tpu.pipeline_mode<synchronous>, transform_indices = @transform_7, window_bounds = array<i64: 16, 32>}, {pipeline_mode = #tpu.pipeline_mode<synchronous>, transform_indices = @transform_8, window_bounds = array<i64: 16, 32>}, {pipeline_mode = #tpu.pipeline_mode<synchronous>, transform_indices = @transform_9, window_bounds = array<i64: 1, 32>}, {pipeline_mode = #tpu.pipeline_mode<synchronous>, transform_indices = @transform_10, window_bounds = array<i64: 32, 64>}, {pipeline_mode = #tpu.pipeline_mode<synchronous>, transform_indices = @transform_11, window_bounds = array<i64: 32, 64>}, {pipeline_mode = #tpu.pipeline_mode<synchronous>, transform_indices = @transform_12, window_bounds = array<i64: 1, 64>}, {pipeline_mode = #tpu.pipeline_mode<synchronous>, transform_indices = @transform_13, window_bounds = array<i64: 2, 64, 256>}, {pipeline_mode = #tpu.pipeline_mode<synchronous>, transform_indices = @transform_14, window_bounds = array<i64: 1, 256>}, {pipeline_mode = #tpu.pipeline_mode<synchronous>, transform_indices = @transform_15, window_bounds = array<i64: 256, 32>}, {pipeline_mode = #tpu.pipeline_mode<synchronous>, transform_indices = @transform_16, window_bounds = array<i64: 1, 32>}, {pipeline_mode = #tpu.pipeline_mode<synchronous>, transform_indices = @transform_17, window_bounds = array<i64: 32, 1>}, {pipeline_mode = #tpu.pipeline_mode<synchronous>, transform_indices = @transform_18, window_bounds = array<i64: 1, 1>}, {transform_indices = @transform_19, window_bounds = array<i64: 8, 1>}]} {
    %c0 = arith.constant 0 : index
    %c0_0 = arith.constant 0 : index
    %0 = vector.load %arg1[%c0, %c0_0] : memref<256x4xf32, #tpu.memory_space<vmem>>, vector<256x4xf32>
    %c0_1 = arith.constant 0 : index
    %c0_2 = arith.constant 0 : index
    %1 = vector.load %arg2[%c0_1, %c0_2] : memref<4x8xf32, #tpu.memory_space<vmem>>, vector<4x8xf32>
    %c0_3 = arith.constant 0 : index
    %c0_4 = arith.constant 0 : index
    %2 = vector.load %arg3[%c0_3, %c0_4] : memref<4x8xf32, #tpu.memory_space<vmem>>, vector<4x8xf32>
    %c0_5 = arith.constant 0 : index
    %c0_6 = arith.constant 0 : index
    %3 = vector.load %arg4[%c0_5, %c0_6] : memref<1x8xf32, #tpu.memory_space<vmem>>, vector<1x8xf32>
    %4 = vector.extract_strided_slice %0 {offsets = [8, 0], sizes = [248, 4], strides = [1, 1]} : vector<256x4xf32> to vector<248x4xf32>
    %cst = arith.constant 0.000000e+00 : f32
    %5 = vector.broadcast %cst : f32 to vector<8x4xf32>
    %6 = tpu.concatenate %4, %5 in 0 : vector<248x4xf32>, vector<8x4xf32> -> vector<256x4xf32>
    %cst_7 = arith.constant dense<0.000000e+00> : vector<256x8xf32>
    %7 = tpu.matmul %0, %1, %cst_7 {dimension_numbers = #tpu.dot_dimension_numbers<[1], [0], [0], [1], [0, 0, 1, 1], [], []>} : vector<256x4xf32>, vector<4x8xf32>, vector<256x8xf32> -> vector<256x8xf32>
    %cst_8 = arith.constant dense<0.000000e+00> : vector<256x8xf32>
    %8 = tpu.matmul %6, %2, %cst_8 {dimension_numbers = #tpu.dot_dimension_numbers<[1], [0], [0], [1], [0, 0, 1, 1], [], []>} : vector<256x4xf32>, vector<4x8xf32>, vector<256x8xf32> -> vector<256x8xf32>
    %9 = arith.addf %7, %8 : vector<256x8xf32>
    %10 = vector.broadcast %3 : vector<1x8xf32> to vector<256x8xf32>
    %11 = arith.addf %9, %10 : vector<256x8xf32>
    %cst_9 = arith.constant 0.000000e+00 : f32
    %12 = vector.broadcast %cst_9 : f32 to vector<256x8xf32>
    %13 = arith.maximumf %11, %12 : vector<256x8xf32>
    %14 = vector.shape_cast %13 : vector<256x8xf32> to vector<16x16x8xf32>
    %15 = vector.extract_strided_slice %14 {offsets = [0, 0, 0], sizes = [16, 8, 8], strides = [1, 1, 1]} : vector<16x16x8xf32> to vector<16x8x8xf32>
    %16 = vector.extract_strided_slice %14 {offsets = [0, 8, 0], sizes = [16, 8, 8], strides = [1, 1, 1]} : vector<16x16x8xf32> to vector<16x8x8xf32>
    %17 = arith.maximumf %15, %16 : vector<16x8x8xf32>
    %18 = vector.shape_cast %17 : vector<16x8x8xf32> to vector<128x8xf32>
    %c0_10 = arith.constant 0 : index
    %c0_11 = arith.constant 0 : index
    %19 = vector.load %arg5[%c0_10, %c0_11] : memref<8x16xf32, #tpu.memory_space<vmem>>, vector<8x16xf32>
    %c0_12 = arith.constant 0 : index
    %c0_13 = arith.constant 0 : index
    %20 = vector.load %arg6[%c0_12, %c0_13] : memref<8x16xf32, #tpu.memory_space<vmem>>, vector<8x16xf32>
    %c0_14 = arith.constant 0 : index
    %c0_15 = arith.constant 0 : index
    %21 = vector.load %arg7[%c0_14, %c0_15] : memref<1x16xf32, #tpu.memory_space<vmem>>, vector<1x16xf32>
    %22 = vector.extract_strided_slice %18 {offsets = [8, 0], sizes = [120, 8], strides = [1, 1]} : vector<128x8xf32> to vector<120x8xf32>
    %cst_16 = arith.constant 0.000000e+00 : f32
    %23 = vector.broadcast %cst_16 : f32 to vector<8x8xf32>
    %24 = tpu.concatenate %22, %23 in 0 : vector<120x8xf32>, vector<8x8xf32> -> vector<128x8xf32>
    %cst_17 = arith.constant dense<0.000000e+00> : vector<128x16xf32>
    %25 = tpu.matmul %18, %19, %cst_17 {dimension_numbers = #tpu.dot_dimension_numbers<[1], [0], [0], [1], [0, 0, 1, 1], [], []>} : vector<128x8xf32>, vector<8x16xf32>, vector<128x16xf32> -> vector<128x16xf32>
    %cst_18 = arith.constant dense<0.000000e+00> : vector<128x16xf32>
    %26 = tpu.matmul %24, %20, %cst_18 {dimension_numbers = #tpu.dot_dimension_numbers<[1], [0], [0], [1], [0, 0, 1, 1], [], []>} : vector<128x8xf32>, vector<8x16xf32>, vector<128x16xf32> -> vector<128x16xf32>
    %27 = arith.addf %25, %26 : vector<128x16xf32>
    %28 = vector.broadcast %21 : vector<1x16xf32> to vector<128x16xf32>
    %29 = arith.addf %27, %28 : vector<128x16xf32>
    %cst_19 = arith.constant 0.000000e+00 : f32
    %30 = vector.broadcast %cst_19 : f32 to vector<128x16xf32>
    %31 = arith.maximumf %29, %30 : vector<128x16xf32>
    %32 = vector.shape_cast %31 : vector<128x16xf32> to vector<8x16x16xf32>
    %33 = vector.extract_strided_slice %32 {offsets = [0, 0, 0], sizes = [8, 8, 16], strides = [1, 1, 1]} : vector<8x16x16xf32> to vector<8x8x16xf32>
    %34 = vector.extract_strided_slice %32 {offsets = [0, 8, 0], sizes = [8, 8, 16], strides = [1, 1, 1]} : vector<8x16x16xf32> to vector<8x8x16xf32>
    %35 = arith.maximumf %33, %34 : vector<8x8x16xf32>
    %36 = vector.shape_cast %35 : vector<8x8x16xf32> to vector<64x16xf32>
    %c0_20 = arith.constant 0 : index
    %c0_21 = arith.constant 0 : index
    %37 = vector.load %arg8[%c0_20, %c0_21] : memref<16x32xf32, #tpu.memory_space<vmem>>, vector<16x32xf32>
    %c0_22 = arith.constant 0 : index
    %c0_23 = arith.constant 0 : index
    %38 = vector.load %arg9[%c0_22, %c0_23] : memref<16x32xf32, #tpu.memory_space<vmem>>, vector<16x32xf32>
    %c0_24 = arith.constant 0 : index
    %c0_25 = arith.constant 0 : index
    %39 = vector.load %arg10[%c0_24, %c0_25] : memref<1x32xf32, #tpu.memory_space<vmem>>, vector<1x32xf32>
    %40 = vector.extract_strided_slice %36 {offsets = [8, 0], sizes = [56, 16], strides = [1, 1]} : vector<64x16xf32> to vector<56x16xf32>
    %cst_26 = arith.constant 0.000000e+00 : f32
    %41 = vector.broadcast %cst_26 : f32 to vector<8x16xf32>
    %42 = tpu.concatenate %40, %41 in 0 : vector<56x16xf32>, vector<8x16xf32> -> vector<64x16xf32>
    %cst_27 = arith.constant dense<0.000000e+00> : vector<64x32xf32>
    %43 = tpu.matmul %36, %37, %cst_27 {dimension_numbers = #tpu.dot_dimension_numbers<[1], [0], [0], [1], [0, 0, 1, 1], [], []>} : vector<64x16xf32>, vector<16x32xf32>, vector<64x32xf32> -> vector<64x32xf32>
    %cst_28 = arith.constant dense<0.000000e+00> : vector<64x32xf32>
    %44 = tpu.matmul %42, %38, %cst_28 {dimension_numbers = #tpu.dot_dimension_numbers<[1], [0], [0], [1], [0, 0, 1, 1], [], []>} : vector<64x16xf32>, vector<16x32xf32>, vector<64x32xf32> -> vector<64x32xf32>
    %45 = arith.addf %43, %44 : vector<64x32xf32>
    %46 = vector.broadcast %39 : vector<1x32xf32> to vector<64x32xf32>
    %47 = arith.addf %45, %46 : vector<64x32xf32>
    %cst_29 = arith.constant 0.000000e+00 : f32
    %48 = vector.broadcast %cst_29 : f32 to vector<64x32xf32>
    %49 = arith.maximumf %47, %48 : vector<64x32xf32>
    %50 = vector.shape_cast %49 : vector<64x32xf32> to vector<4x16x32xf32>
    %51 = vector.extract_strided_slice %50 {offsets = [0, 0, 0], sizes = [4, 8, 32], strides = [1, 1, 1]} : vector<4x16x32xf32> to vector<4x8x32xf32>
    %52 = vector.extract_strided_slice %50 {offsets = [0, 8, 0], sizes = [4, 8, 32], strides = [1, 1, 1]} : vector<4x16x32xf32> to vector<4x8x32xf32>
    %53 = arith.maximumf %51, %52 : vector<4x8x32xf32>
    %54 = vector.shape_cast %53 : vector<4x8x32xf32> to vector<32x32xf32>
    %c0_30 = arith.constant 0 : index
    %c0_31 = arith.constant 0 : index
    %55 = vector.load %arg11[%c0_30, %c0_31] : memref<32x64xf32, #tpu.memory_space<vmem>>, vector<32x64xf32>
    %c0_32 = arith.constant 0 : index
    %c0_33 = arith.constant 0 : index
    %56 = vector.load %arg12[%c0_32, %c0_33] : memref<32x64xf32, #tpu.memory_space<vmem>>, vector<32x64xf32>
    %c0_34 = arith.constant 0 : index
    %c0_35 = arith.constant 0 : index
    %57 = vector.load %arg13[%c0_34, %c0_35] : memref<1x64xf32, #tpu.memory_space<vmem>>, vector<1x64xf32>
    %58 = vector.extract_strided_slice %54 {offsets = [8, 0], sizes = [24, 32], strides = [1, 1]} : vector<32x32xf32> to vector<24x32xf32>
    %cst_36 = arith.constant 0.000000e+00 : f32
    %59 = vector.broadcast %cst_36 : f32 to vector<8x32xf32>
    %60 = tpu.concatenate %58, %59 in 0 : vector<24x32xf32>, vector<8x32xf32> -> vector<32x32xf32>
    %cst_37 = arith.constant dense<0.000000e+00> : vector<32x64xf32>
    %61 = tpu.matmul %54, %55, %cst_37 {dimension_numbers = #tpu.dot_dimension_numbers<[1], [0], [0], [1], [0, 0, 1, 1], [], []>} : vector<32x32xf32>, vector<32x64xf32>, vector<32x64xf32> -> vector<32x64xf32>
    %cst_38 = arith.constant dense<0.000000e+00> : vector<32x64xf32>
    %62 = tpu.matmul %60, %56, %cst_38 {dimension_numbers = #tpu.dot_dimension_numbers<[1], [0], [0], [1], [0, 0, 1, 1], [], []>} : vector<32x32xf32>, vector<32x64xf32>, vector<32x64xf32> -> vector<32x64xf32>
    %63 = arith.addf %61, %62 : vector<32x64xf32>
    %64 = vector.broadcast %57 : vector<1x64xf32> to vector<32x64xf32>
    %65 = arith.addf %63, %64 : vector<32x64xf32>
    %66 = vector.shape_cast %65 : vector<32x64xf32> to vector<2x16x64xf32>
    %67 = vector.extract_strided_slice %66 {offsets = [0, 0, 0], sizes = [2, 8, 64], strides = [1, 1, 1]} : vector<2x16x64xf32> to vector<2x8x64xf32>
    %68 = vector.extract_strided_slice %66 {offsets = [0, 8, 0], sizes = [2, 8, 64], strides = [1, 1, 1]} : vector<2x16x64xf32> to vector<2x8x64xf32>
    %69 = arith.maximumf %67, %68 : vector<2x8x64xf32>
    %70 = vector.shape_cast %69 : vector<2x8x64xf32> to vector<16x64xf32>
    %c0_39 = arith.constant 0 : index
    %c0_40 = arith.constant 0 : index
    %71 = vector.load %arg15[%c0_39, %c0_40] : memref<1x256xf32, #tpu.memory_space<vmem>>, vector<1x256xf32>
    %72 = vector.extract_strided_slice %70 {offsets = [0, 0], sizes = [8, 64], strides = [1, 1]} : vector<16x64xf32> to vector<8x64xf32>
    %c0_41 = arith.constant 0 : index
    %c0_42 = arith.constant 0 : index
    %c0_43 = arith.constant 0 : index
    %73 = vector.load %arg14[%c0_41, %c0_42, %c0_43] : memref<2x64x256xf32, #tpu.memory_space<vmem>>, vector<1x64x256xf32>
    %74 = vector.shape_cast %73 : vector<1x64x256xf32> to vector<64x256xf32>
    %cst_44 = arith.constant dense<0.000000e+00> : vector<8x256xf32>
    %75 = tpu.matmul %72, %74, %cst_44 {dimension_numbers = #tpu.dot_dimension_numbers<[1], [0], [0], [1], [0, 0, 1, 1], [], []>} : vector<8x64xf32>, vector<64x256xf32>, vector<8x256xf32> -> vector<8x256xf32>
    %76 = vector.broadcast %71 : vector<1x256xf32> to vector<8x256xf32>
    %77 = arith.addf %76, %75 : vector<8x256xf32>
    %78 = vector.extract_strided_slice %70 {offsets = [8, 0], sizes = [8, 64], strides = [1, 1]} : vector<16x64xf32> to vector<8x64xf32>
    %c1 = arith.constant 1 : index
    %c0_45 = arith.constant 0 : index
    %c0_46 = arith.constant 0 : index
    %79 = vector.load %arg14[%c1, %c0_45, %c0_46] : memref<2x64x256xf32, #tpu.memory_space<vmem>>, vector<1x64x256xf32>
    %80 = vector.shape_cast %79 : vector<1x64x256xf32> to vector<64x256xf32>
    %cst_47 = arith.constant dense<0.000000e+00> : vector<8x256xf32>
    %81 = tpu.matmul %78, %80, %cst_47 {dimension_numbers = #tpu.dot_dimension_numbers<[1], [0], [0], [1], [0, 0, 1, 1], [], []>} : vector<8x64xf32>, vector<64x256xf32>, vector<8x256xf32> -> vector<8x256xf32>
    %82 = arith.addf %77, %81 : vector<8x256xf32>
    %c0_48 = arith.constant 0 : index
    %c0_49 = arith.constant 0 : index
    %83 = vector.load %arg16[%c0_48, %c0_49] : memref<256x32xf32, #tpu.memory_space<vmem>>, vector<256x32xf32>
    %cst_50 = arith.constant dense<0.000000e+00> : vector<8x32xf32>
    %84 = tpu.matmul %82, %83, %cst_50 {dimension_numbers = #tpu.dot_dimension_numbers<[1], [0], [0], [1], [0, 0, 1, 1], [], []>} : vector<8x256xf32>, vector<256x32xf32>, vector<8x32xf32> -> vector<8x32xf32>
    %c0_51 = arith.constant 0 : index
    %c0_52 = arith.constant 0 : index
    %85 = vector.load %arg17[%c0_51, %c0_52] : memref<1x32xf32, #tpu.memory_space<vmem>>, vector<1x32xf32>
    %86 = vector.broadcast %85 : vector<1x32xf32> to vector<8x32xf32>
    %87 = arith.addf %84, %86 : vector<8x32xf32>
    %cst_53 = arith.constant 0.000000e+00 : f32
    %88 = vector.broadcast %cst_53 : f32 to vector<8x32xf32>
    %89 = arith.maximumf %87, %88 : vector<8x32xf32>
    %c0_54 = arith.constant 0 : index
    %c0_55 = arith.constant 0 : index
    %90 = vector.load %arg18[%c0_54, %c0_55] : memref<32x1xf32, #tpu.memory_space<vmem>>, vector<32x1xf32>
    %cst_56 = arith.constant dense<0.000000e+00> : vector<8x1xf32>
    %91 = tpu.matmul %89, %90, %cst_56 {dimension_numbers = #tpu.dot_dimension_numbers<[1], [0], [0], [1], [0, 0, 1, 1], [], []>} : vector<8x32xf32>, vector<32x1xf32>, vector<8x1xf32> -> vector<8x1xf32>
    %c0_57 = arith.constant 0 : index
    %c0_58 = arith.constant 0 : index
    %92 = vector.load %arg19[%c0_57, %c0_58] : memref<1x1xf32, #tpu.memory_space<vmem>>, vector<1x1xf32>
    %93 = vector.broadcast %92 : vector<1x1xf32> to vector<8x1xf32>
    %94 = arith.addf %91, %93 : vector<8x1xf32>
    %c0_59 = arith.constant 0 : index
    %c0_60 = arith.constant 0 : index
    %95 = vector.load %arg20[%c0_59, %c0_60] : memref<8x1xf32, #tpu.memory_space<vmem>>, vector<8x1xf32>
    tpu.vector_store %arg20[%c0_59, %c0_60], %94 {strides = array<i32>} : memref<8x1xf32, #tpu.memory_space<vmem>>, vector<8x1xf32>,
    return
  }
  func.func @transform_0(%arg0: i32) -> (i32, i32) {
    %c0_i32 = arith.constant 0 : i32
    %c0_i32_0 = arith.constant 0 : i32
    return %arg0, %c0_i32 : i32, i32
  }
  func.func @transform_1(%arg0: i32) -> (i32, i32) {
    %c0_i32 = arith.constant 0 : i32
    %c0_i32_0 = arith.constant 0 : i32
    %c0_i32_1 = arith.constant 0 : i32
    return %c0_i32, %c0_i32_0 : i32, i32
  }
  func.func @transform_2(%arg0: i32) -> (i32, i32) {
    %c0_i32 = arith.constant 0 : i32
    %c0_i32_0 = arith.constant 0 : i32
    %c0_i32_1 = arith.constant 0 : i32
    return %c0_i32, %c0_i32_0 : i32, i32
  }
  func.func @transform_3(%arg0: i32) -> (i32, i32) {
    %c0_i32 = arith.constant 0 : i32
    %c0_i32_0 = arith.constant 0 : i32
    %c0_i32_1 = arith.constant 0 : i32
    return %c0_i32, %c0_i32_0 : i32, i32
  }
  func.func @transform_4(%arg0: i32) -> (i32, i32) {
    %c0_i32 = arith.constant 0 : i32
    %c0_i32_0 = arith.constant 0 : i32
    %c0_i32_1 = arith.constant 0 : i32
    return %c0_i32, %c0_i32_0 : i32, i32
  }
  func.func @transform_5(%arg0: i32) -> (i32, i32) {
    %c0_i32 = arith.constant 0 : i32
    %c0_i32_0 = arith.constant 0 : i32
    %c0_i32_1 = arith.constant 0 : i32
    return %c0_i32, %c0_i32_0 : i32, i32
  }
  func.func @transform_6(%arg0: i32) -> (i32, i32) {
    %c0_i32 = arith.constant 0 : i32
    %c0_i32_0 = arith.constant 0 : i32
    %c0_i32_1 = arith.constant 0 : i32
    return %c0_i32, %c0_i32_0 : i32, i32
  }
  func.func @transform_7(%arg0: i32) -> (i32, i32) {
    %c0_i32 = arith.constant 0 : i32
    %c0_i32_0 = arith.constant 0 : i32
    %c0_i32_1 = arith.constant 0 : i32
    return %c0_i32, %c0_i32_0 : i32, i32
  }
  func.func @transform_8(%arg0: i32) -> (i32, i32) {
    %c0_i32 = arith.constant 0 : i32
    %c0_i32_0 = arith.constant 0 : i32
    %c0_i32_1 = arith.constant 0 : i32
    return %c0_i32, %c0_i32_0 : i32, i32
  }
  func.func @transform_9(%arg0: i32) -> (i32, i32) {
    %c0_i32 = arith.constant 0 : i32
    %c0_i32_0 = arith.constant 0 : i32
    %c0_i32_1 = arith.constant 0 : i32
    return %c0_i32, %c0_i32_0 : i32, i32
  }
  func.func @transform_10(%arg0: i32) -> (i32, i32) {
    %c0_i32 = arith.constant 0 : i32
    %c0_i32_0 = arith.constant 0 : i32
    %c0_i32_1 = arith.constant 0 : i32
    return %c0_i32, %c0_i32_0 : i32, i32
  }
  func.func @transform_11(%arg0: i32) -> (i32, i32) {
    %c0_i32 = arith.constant 0 : i32
    %c0_i32_0 = arith.constant 0 : i32
    %c0_i32_1 = arith.constant 0 : i32
    return %c0_i32, %c0_i32_0 : i32, i32
  }
  func.func @transform_12(%arg0: i32) -> (i32, i32) {
    %c0_i32 = arith.constant 0 : i32
    %c0_i32_0 = arith.constant 0 : i32
    %c0_i32_1 = arith.constant 0 : i32
    return %c0_i32, %c0_i32_0 : i32, i32
  }
  func.func @transform_13(%arg0: i32) -> (i32, i32, i32) {
    %c0_i32 = arith.constant 0 : i32
    %c0_i32_0 = arith.constant 0 : i32
    %c0_i32_1 = arith.constant 0 : i32
    %c0_i32_2 = arith.constant 0 : i32
    return %c0_i32, %c0_i32_0, %c0_i32_1 : i32, i32, i32
  }
  func.func @transform_14(%arg0: i32) -> (i32, i32) {
    %c0_i32 = arith.constant 0 : i32
    %c0_i32_0 = arith.constant 0 : i32
    %c0_i32_1 = arith.constant 0 : i32
    return %c0_i32, %c0_i32_0 : i32, i32
  }
  func.func @transform_15(%arg0: i32) -> (i32, i32) {
    %c0_i32 = arith.constant 0 : i32
    %c0_i32_0 = arith.constant 0 : i32
    %c0_i32_1 = arith.constant 0 : i32
    return %c0_i32, %c0_i32_0 : i32, i32
  }
  func.func @transform_16(%arg0: i32) -> (i32, i32) {
    %c0_i32 = arith.constant 0 : i32
    %c0_i32_0 = arith.constant 0 : i32
    %c0_i32_1 = arith.constant 0 : i32
    return %c0_i32, %c0_i32_0 : i32, i32
  }
  func.func @transform_17(%arg0: i32) -> (i32, i32) {
    %c0_i32 = arith.constant 0 : i32
    %c0_i32_0 = arith.constant 0 : i32
    %c0_i32_1 = arith.constant 0 : i32
    return %c0_i32, %c0_i32_0 : i32, i32
  }
  func.func @transform_18(%arg0: i32) -> (i32, i32) {
    %c0_i32 = arith.constant 0 : i32
    %c0_i32_0 = arith.constant 0 : i32
    %c0_i32_1 = arith.constant 0 : i32
    return %c0_i32, %c0_i32_0 : i32, i32
  }
  func.func @transform_19(%arg0: i32) -> (i32, i32) {
    %c0_i32 = arith.constant 0 : i32
    %c0_i32_0 = arith.constant 0 : i32
    return %arg0, %c0_i32 : i32, i32
  }
}

</mosaic_0001>

<llo_original>
// kernel: tpu_custom_call.1
$region0: #{tpu_custom_call.1}
  #allocation0 [shape = 'u32[]', space=smem, size = 0x4, offset = 0x4, fixed_abs, tag = 'smem constant byte address 0x4 - core index']
  #allocation1 [shape = 'u32[144,128]{1,0:T(1,128)}', space=vmem, size = 0x12000, scoped, tag = 'internal scratch']
  #allocation2 [shape = 'f32[1,1]{1,0:T(1,128)S(1)}', space=vmem, size = 0x200, scoped, tag = 'scoped memory for tpu_custom_call.1']
  %s0 = inlined_call_operand.vmem [shape: f32[256,4], index: 0, kind: input, shape index: {}]
  %s1 = inlined_call_operand.vmem [shape: f32[4,8], index: 1, kind: input, shape index: {}]
  %s2 = inlined_call_operand.vmem [shape: f32[4,8], index: 2, kind: input, shape index: {}]
  %s3 = inlined_call_operand.vmem [shape: f32[1,8], index: 3, kind: input, shape index: {}]
  %s4 = inlined_call_operand.vmem [shape: f32[8,16], index: 4, kind: input, shape index: {}]
  %s5 = inlined_call_operand.vmem [shape: f32[8,16], index: 5, kind: input, shape index: {}]
  %s6 = inlined_call_operand.vmem [shape: f32[1,16], index: 6, kind: input, shape index: {}]
  %s7 = inlined_call_operand.vmem [shape: f32[16,32], index: 7, kind: input, shape index: {}]
  %s8 = inlined_call_operand.vmem [shape: f32[16,32], index: 8, kind: input, shape index: {}]
  %s9 = inlined_call_operand.vmem [shape: f32[1,32], index: 9, kind: input, shape index: {}]
  %s10 = inlined_call_operand.vmem [shape: f32[32,64], index: 10, kind: input, shape index: {}]
  %s11 = inlined_call_operand.vmem [shape: f32[32,64], index: 11, kind: input, shape index: {}]
  %s12 = inlined_call_operand.vmem [shape: f32[1,64], index: 12, kind: input, shape index: {}]
  %s13 = inlined_call_operand.vmem [shape: f32[2,64,256], index: 13, kind: input, shape index: {}]
  %s14 = inlined_call_operand.vmem [shape: f32[1,256], index: 14, kind: input, shape index: {}]
  %s15 = inlined_call_operand.vmem [shape: f32[256,32], index: 15, kind: input, shape index: {}]
  %s16 = inlined_call_operand.vmem [shape: f32[1,32], index: 16, kind: input, shape index: {}]
  %s17 = inlined_call_operand.vmem [shape: f32[32,1], index: 17, kind: input, shape index: {}]
  %s18 = inlined_call_operand.<no memory space> [shape: f32[1,1], index: 18, kind: input, shape index: {}]
  %s19 = inlined_call_operand.vmem [shape: f32[8,1], index: 19, kind: output, shape index: {}]
  %s20 = sld [smem:[#allocation0]]
  $region86: #{tpu_custom_call.1} parent=0
    _
  %s22 = ssub.s32 1, %s20
  %s23 = scalar_select 0, %s22, %s20
  %v24 = vstv %s18
  %25 = vst [vmem:[#allocation2] sm:$0x1] %v24
  // Predicated region
  $region2: #{tpu_custom_call.1} parent=0 // pred_check
    _
  $region3: #{tpu_custom_call.1} parent=0 // pred_check_branch
    %27 = sbr.rel (0) target = $region5
  $region4: #{tpu_custom_call.1} parent=0 // pred_region
    _
  $region5: #{tpu_custom_call.1} parent=0 // pred_fallthru
    _
  // Predicated region
  $region6: #{tpu_custom_call.1} parent=0 // pred_check
    _
  $region7: #{tpu_custom_call.1} parent=0 // pred_check_branch
    %29 = sbr.rel (0) target = $region9
  $region8: #{tpu_custom_call.1} parent=0 // pred_region
    _
  $region9: #{tpu_custom_call.1} parent=0 // pred_fallthru
    _
  // Predicated region
  $region10: #{tpu_custom_call.1} parent=0 // pred_check
    _
  $region11: #{tpu_custom_call.1} parent=0 // pred_check_branch
    %31 = sbr.rel (0) target = $region13
  $region12: #{tpu_custom_call.1} parent=0 // pred_region
    _
  $region13: #{tpu_custom_call.1} parent=0 // pred_fallthru
    _
  // Predicated region
  $region14: #{tpu_custom_call.1} parent=0 // pred_check
    _
  $region15: #{tpu_custom_call.1} parent=0 // pred_check_branch
    %33 = sbr.rel (0) target = $region17
  $region16: #{tpu_custom_call.1} parent=0 // pred_region
    _
  $region17: #{tpu_custom_call.1} parent=0 // pred_fallthru
    _
  // Predicated region
  $region18: #{tpu_custom_call.1} parent=0 // pred_check
    _
  $region19: #{tpu_custom_call.1} parent=0 // pred_check_branch
    %35 = sbr.rel (0) target = $region21
  $region20: #{tpu_custom_call.1} parent=0 // pred_region
    _
  $region21: #{tpu_custom_call.1} parent=0 // pred_fallthru
    _
  // Predicated region
  $region22: #{tpu_custom_call.1} parent=0 // pred_check
    _
  $region23: #{tpu_custom_call.1} parent=0 // pred_check_branch
    %37 = sbr.rel (0) target = $region25
  $region24: #{tpu_custom_call.1} parent=0 // pred_region
    _
  $region25: #{tpu_custom_call.1} parent=0 // pred_fallthru
    _
  // Predicated region
  $region26: #{tpu_custom_call.1} parent=0 // pred_check
    _
  $region27: #{tpu_custom_call.1} parent=0 // pred_check_branch
    %39 = sbr.rel (0) target = $region29
  $region28: #{tpu_custom_call.1} parent=0 // pred_region
    _
  $region29: #{tpu_custom_call.1} parent=0 // pred_fallthru
    _
  // Predicated region
  $region30: #{tpu_custom_call.1} parent=0 // pred_check
    _
  $region31: #{tpu_custom_call.1} parent=0 // pred_check_branch
    %41 = sbr.rel (0) target = $region33
  $region32: #{tpu_custom_call.1} parent=0 // pred_region
    _
  $region33: #{tpu_custom_call.1} parent=0 // pred_fallthru
    _
  // Predicated region
  $region34: #{tpu_custom_call.1} parent=0 // pred_check
    _
  $region35: #{tpu_custom_call.1} parent=0 // pred_check_branch
    %43 = sbr.rel (0) target = $region37
  $region36: #{tpu_custom_call.1} parent=0 // pred_region
    _
  $region37: #{tpu_custom_call.1} parent=0 // pred_fallthru
    _
  // Predicated region
  $region38: #{tpu_custom_call.1} parent=0 // pred_check
    _
  $region39: #{tpu_custom_call.1} parent=0 // pred_check_branch
    %45 = sbr.rel (0) target = $region41
  $region40: #{tpu_custom_call.1} parent=0 // pred_region
    _
  $region41: #{tpu_custom_call.1} parent=0 // pred_fallthru
    _
  // Predicated region
  $region42: #{tpu_custom_call.1} parent=0 // pred_check
    _
  $region43: #{tpu_custom_call.1} parent=0 // pred_check_branch
    %47 = sbr.rel (0) target = $region45
  $region44: #{tpu_custom_call.1} parent=0 // pred_region
    _
  $region45: #{tpu_custom_call.1} parent=0 // pred_fallthru
    _
  // Predicated region
  $region46: #{tpu_custom_call.1} parent=0 // pred_check
    _
  $region47: #{tpu_custom_call.1} parent=0 // pred_check_branch
    %49 = sbr.rel (0) target = $region49
  $region48: #{tpu_custom_call.1} parent=0 // pred_region
    _
  $region49: #{tpu_custom_call.1} parent=0 // pred_fallthru
    _
  // Predicated region
  $region50: #{tpu_custom_call.1} parent=0 // pred_check
    _
  $region51: #{tpu_custom_call.1} parent=0 // pred_check_branch
    %51 = sbr.rel (0) target = $region53
  $region52: #{tpu_custom_call.1} parent=0 // pred_region
    _
  $region53: #{tpu_custom_call.1} parent=0 // pred_fallthru
    _
  // Predicated region
  $region54: #{tpu_custom_call.1} parent=0 // pred_check
    _
  $region55: #{tpu_custom_call.1} parent=0 // pred_check_branch
    %53 = sbr.rel (0) target = $region57
  $region56: #{tpu_custom_call.1} parent=0 // pred_region
    _
  $region57: #{tpu_custom_call.1} parent=0 // pred_fallthru
    _
  // Predicated region
  $region58: #{tpu_custom_call.1} parent=0 // pred_check
    _
  $region59: #{tpu_custom_call.1} parent=0 // pred_check_branch
    %55 = sbr.rel (0) target = $region61
  $region60: #{tpu_custom_call.1} parent=0 // pred_region
    _
  $region61: #{tpu_custom_call.1} parent=0 // pred_fallthru
    _
  // Predicated region
  $region62: #{tpu_custom_call.1} parent=0 // pred_check
    _
  $region63: #{tpu_custom_call.1} parent=0 // pred_check_branch
    %57 = sbr.rel (0) target = $region65
  $region64: #{tpu_custom_call.1} parent=0 // pred_region
    _
  $region65: #{tpu_custom_call.1} parent=0 // pred_fallthru
    _
  // Predicated region
  $region66: #{tpu_custom_call.1} parent=0 // pred_check
    _
  $region67: #{tpu_custom_call.1} parent=0 // pred_check_branch
    %59 = sbr.rel (0) target = $region69
  $region68: #{tpu_custom_call.1} parent=0 // pred_region
    _
  $region69: #{tpu_custom_call.1} parent=0 // pred_fallthru
    _
  // Predicated region
  $region70: #{tpu_custom_call.1} parent=0 // pred_check
    _
  $region71: #{tpu_custom_call.1} parent=0 // pred_check_branch
    %61 = sbr.rel (0) target = $region73
  $region72: #{tpu_custom_call.1} parent=0 // pred_region
    _
  $region73: #{tpu_custom_call.1} parent=0 // pred_fallthru
    _
  // Predicated region
  $region74: #{tpu_custom_call.1} parent=0 // pred_check
    _
  $region75: #{tpu_custom_call.1} parent=0 // pred_check_branch
    %63 = sbr.rel (0) target = $region77
  $region76: #{tpu_custom_call.1} parent=0 // pred_region
    _
  $region77: #{tpu_custom_call.1} parent=0 // pred_fallthru
    _
  %v64 = vld [vmem:[%s0] sm:$0xff]
  %v65 = vld [vmem:[%s0 + $0x8] sm:$0xff]
  %v66 = vld [vmem:[%s0 + $0x10] sm:$0xff]
  %v67 = vld [vmem:[%s0 + $0x18] sm:$0xff]
  %v68 = vld [vmem:[%s0 + $0x20] sm:$0xff]
  %v69 = vld [vmem:[%s0 + $0x28] sm:$0xff]
  %v70 = vld [vmem:[%s0 + $0x30] sm:$0xff]
  %v71 = vld [vmem:[%s0 + $0x38] sm:$0xff]
  %v72 = vld [vmem:[%s0 + $0x40] sm:$0xff]
  %v73 = vld [vmem:[%s0 + $0x48] sm:$0xff]
  %v74 = vld [vmem:[%s0 + $0x50] sm:$0xff]
  %v75 = vld [vmem:[%s0 + $0x58] sm:$0xff]
  %v76 = vld [vmem:[%s0 + $0x60] sm:$0xff]
  %v77 = vld [vmem:[%s0 + $0x68] sm:$0xff]
  %v78 = vld [vmem:[%s0 + $0x70] sm:$0xff]
  %v79 = vld [vmem:[%s0 + $0x78] sm:$0xff]
  %v80 = vld [vmem:[%s0 + $0x80] sm:$0xff]
  %v81 = vld [vmem:[%s0 + $0x88] sm:$0xff]
  %v82 = vld [vmem:[%s0 + $0x90] sm:$0xff]
  %v83 = vld [vmem:[%s0 + $0x98] sm:$0xff]
  %v84 = vld [vmem:[%s0 + $0xa0] sm:$0xff]
  %v85 = vld [vmem:[%s0 + $0xa8] sm:$0xff]
  %v86 = vld [vmem:[%s0 + $0xb0] sm:$0xff]
  %v87 = vld [vmem:[%s0 + $0xb8] sm:$0xff]
  %v88 = vld [vmem:[%s0 + $0xc0] sm:$0xff]
  %v89 = vld [vmem:[%s0 + $0xc8] sm:$0xff]
  %v90 = vld [vmem:[%s0 + $0xd0] sm:$0xff]
  %v91 = vld [vmem:[%s0 + $0xd8] sm:$0xff]
  %v92 = vld [vmem:[%s0 + $0xe0] sm:$0xff]
  %v93 = vld [vmem:[%s0 + $0xe8] sm:$0xff]
  %v94 = vld [vmem:[%s0 + $0xf0] sm:$0xff]
  %v95 = vld [vmem:[%s0 + $0xf8] sm:$0xff]
  %v96 = vld [vmem:[%s1] sm:$0xf]
  %v97 = vld [vmem:[%s2] sm:$0xf]
  %v98 = vld [vmem:[%s3] sm:$0x1]
  %vm99 = vcmask 31744
  %v101 = vsel %vm99, %v65, 0
  %v104 = vsel %vm99, %v66, 0
  %v107 = vsel %vm99, %v67, 0
  %v110 = vsel %vm99, %v68, 0
  %v113 = vsel %vm99, %v69, 0
  %v116 = vsel %vm99, %v70, 0
  %v119 = vsel %vm99, %v71, 0
  %v122 = vsel %vm99, %v72, 0
  %v125 = vsel %vm99, %v73, 0
  %v128 = vsel %vm99, %v74, 0
  %v131 = vsel %vm99, %v75, 0
  %v134 = vsel %vm99, %v76, 0
  %v137 = vsel %vm99, %v77, 0
  %v140 = vsel %vm99, %v78, 0
  %v143 = vsel %vm99, %v79, 0
  %v146 = vsel %vm99, %v80, 0
  %v149 = vsel %vm99, %v81, 0
  %v152 = vsel %vm99, %v82, 0
  %v155 = vsel %vm99, %v83, 0
  %v158 = vsel %vm99, %v84, 0
  %v161 = vsel %vm99, %v85, 0
  %v164 = vsel %vm99, %v86, 0
  %v167 = vsel %vm99, %v87, 0
  %v170 = vsel %vm99, %v88, 0
  %v173 = vsel %vm99, %v89, 0
  %v176 = vsel %vm99, %v90, 0
  %v179 = vsel %vm99, %v91, 0
  %v182 = vsel %vm99, %v92, 0
  %v185 = vsel %vm99, %v93, 0
  %v188 = vsel %vm99, %v94, 0
  %v191 = vsel %vm99, %v95, 0
  %v194 = vsel %vm99, 0.0, 0
  %vm196 = vcmask 1043456
  %v198 = vsel %vm196, %v97, 0
  %200 = vmatprep.subr.mxu0 0.0
  %201 = vmatpush1.msra.mxu0 %v198
  %202 = vmatprep.subr.mxu0 0.0
  %203 = vmatpush1.msra.mxu0 0.0
  %204 = vmatprep.subr.mxu0 0.0
  %205 = vmatpush1.msra.mxu0 0.0
  %206 = vmatprep.subr.mxu0 0.0
  %207 = vmatpush1.msra.mxu0 0.0
  %208 = vmatprep.subr.mxu0 0.0
  %209 = vmatpush1.msra.mxu0 0.0
  %210 = vmatprep.subr.mxu0 0.0
  %211 = vmatpush1.msra.mxu0 0.0
  %212 = vmatprep.subr.mxu0 0.0
  %213 = vmatpush1.msra.mxu0 0.0
  %214 = vmatprep.subr.mxu0 0.0
  %215 = vmatpush1.msra.mxu0 0.0
  %216 = vmatprep.subr.mxu0 0.0
  %217 = vmatpush1.msra.mxu0 0.0
  %218 = vmatprep.subr.mxu0 0.0
  %219 = vmatpush1.msra.mxu0 0.0
  %220 = vmatprep.subr.mxu0 0.0
  %221 = vmatpush1.msra.mxu0 0.0
  %222 = vmatprep.subr.mxu0 0.0
  %223 = vmatpush1.msra.mxu0 0.0
  %224 = vmatprep.subr.mxu0 0.0
  %225 = vmatpush1.msra.mxu0 0.0
  %226 = vmatprep.subr.mxu0 0.0
  %227 = vmatpush1.msra.mxu0 0.0
  %228 = vmatprep.subr.mxu0 0.0
  %229 = vmatpush1.msra.mxu0 0.0
  %230 = vmatprep.subr.mxu0 0.0
  %231 = vmatpush1.msra.mxu0 0.0
  %232 = vmatprep.subr.mxu0 0.0
  %233 = vmatpush1.msra.mxu0 0.0
  %234 = vmatprep.subr.mxu0 0.0
  %235 = vmatpush1.msra.mxu0 0.0
  %236 = vmatprep.subr.mxu0 0.0
  %237 = vmatpush1.msra.mxu0 0.0
  %238 = vmatprep.subr.mxu0 0.0
  %239 = vmatpush1.msra.mxu0 0.0
  %240 = vmatprep.subr.mxu0 0.0
  %241 = vmatpush1.msra.mxu0 0.0
  %242 = vmatprep.subr.mxu0 0.0
  %243 = vmatpush1.msra.mxu0 0.0
  %244 = vmatprep.subr.mxu0 0.0
  %245 = vmatpush1.msra.mxu0 0.0
  %246 = vmatprep.subr.mxu0 0.0
  %247 = vmatpush1.msra.mxu0 0.0
  %248 = vmatprep.subr.mxu0 0.0
  %249 = vmatpush1.msra.mxu0 0.0
  %250 = vmatprep.subr.mxu0 0.0
  %251 = vmatpush1.msra.mxu0 0.0
  %252 = vmatprep.subr.mxu0 0.0
  %253 = vmatpush1.msra.mxu0 0.0
  %254 = vmatprep.subr.mxu0 0.0
  %255 = vmatpush1.msra.mxu0 0.0
  %256 = vmatprep.subr.mxu0 0.0
  %257 = vmatpush1.msra.mxu0 0.0
  %258 = vmatprep.subr.mxu0 0.0
  %259 = vmatpush1.msra.mxu0 0.0
  %260 = vmatprep.subr.mxu0 0.0
  %261 = vmatpush1.msra.mxu0 0.0
  %262 = vmatprep.subr.mxu0 0.0
  %263 = vmatpush1.msra.mxu0 0.0
  %264 = vmatprep.mubr.f32.mxu0 0.0
  %265 = vmatmul.mubr.f32.gmra.mrb[0].mxu0 %v101
  %v266 = vpop.f32.mrb[0].mxu0
  %v267 = vadd.f32 0.0, %v266
  %v268 = vpop.f32.mrb[0].mxu0
  %269 = vmatprep.mubr.f32.mxu0 0.0
  %270 = vmatmul.mubr.f32.gmra.mrb[0].mxu0 %v104
  %v271 = vpop.f32.mrb[0].mxu0
  %v272 = vadd.f32 0.0, %v271
  %v273 = vpop.f32.mrb[0].mxu0
  %274 = vmatprep.mubr.f32.mxu0 0.0
  %275 = vmatmul.mubr.f32.gmra.mrb[0].mxu0 %v107
  %v276 = vpop.f32.mrb[0].mxu0
  %v277 = vadd.f32 0.0, %v276
  %v278 = vpop.f32.mrb[0].mxu0
  %279 = vmatprep.mubr.f32.mxu0 0.0
  %280 = vmatmul.mubr.f32.gmra.mrb[0].mxu0 %v110
  %v281 = vpop.f32.mrb[0].mxu0
  %v282 = vadd.f32 0.0, %v281
  %v283 = vpop.f32.mrb[0].mxu0
  %284 = vmatprep.mubr.f32.mxu0 0.0
  %285 = vmatmul.mubr.f32.gmra.mrb[0].mxu0 %v113
  %v286 = vpop.f32.mrb[0].mxu0
  %v287 = vadd.f32 0.0, %v286
  %v288 = vpop.f32.mrb[0].mxu0
  %289 = vmatprep.mubr.f32.mxu0 0.0
  %290 = vmatmul.mubr.f32.gmra.mrb[0].mxu0 %v116
  %v291 = vpop.f32.mrb[0].mxu0
  %v292 = vadd.f32 0.0, %v291
  %v293 = vpop.f32.mrb[0].mxu0
  %294 = vmatprep.mubr.f32.mxu0 0.0
  %295 = vmatmul.mubr.f32.gmra.mrb[0].mxu0 %v119
  %v296 = vpop.f32.mrb[0].mxu0
  %v297 = vadd.f32 0.0, %v296
  %v298 = vpop.f32.mrb[0].mxu0
  %299 = vmatprep.mubr.f32.mxu0 0.0
  %300 = vmatmul.mubr.f32.gmra.mrb[0].mxu0 %v122
  %v301 = vpop.f32.mrb[0].mxu0
  %v302 = vadd.f32 0.0, %v301
  %v303 = vpop.f32.mrb[0].mxu0
  %304 = vmatprep.mubr.f32.mxu0 0.0
  %305 = vmatmul.mubr.f32.gmra.mrb[0].mxu0 %v125
  %v306 = vpop.f32.mrb[0].mxu0
  %v307 = vadd.f32 0.0, %v306
  %v308 = vpop.f32.mrb[0].mxu0
  %309 = vmatprep.mubr.f32.mxu0 0.0
  %310 = vmatmul.mubr.f32.gmra.mrb[0].mxu0 %v128
  %v311 = vpop.f32.mrb[0].mxu0
  %v312 = vadd.f32 0.0, %v311
  %v313 = vpop.f32.mrb[0].mxu0
  %314 = vmatprep.mubr.f32.mxu0 0.0
  %315 = vmatmul.mubr.f32.gmra.mrb[0].mxu0 %v131
  %v316 = vpop.f32.mrb[0].mxu0
  %v317 = vadd.f32 0.0, %v316
  %v318 = vpop.f32.mrb[0].mxu0
  %319 = vmatprep.mubr.f32.mxu0 0.0
  %320 = vmatmul.mubr.f32.gmra.mrb[0].mxu0 %v134
  %v321 = vpop.f32.mrb[0].mxu0
  %v322 = vadd.f32 0.0, %v321
  %v323 = vpop.f32.mrb[0].mxu0
  %324 = vmatprep.mubr.f32.mxu0 0.0
  %325 = vmatmul.mubr.f32.gmra.mrb[0].mxu0 %v137
  %v326 = vpop.f32.mrb[0].mxu0
  %v327 = vadd.f32 0.0, %v326
  %v328 = vpop.f32.mrb[0].mxu0
  %329 = vmatprep.mubr.f32.mxu0 0.0
  %330 = vmatmul.mubr.f32.gmra.mrb[0].mxu0 %v140
  %v331 = vpop.f32.mrb[0].mxu0
  %v332 = vadd.f32 0.0, %v331
  %v333 = vpop.f32.mrb[0].mxu0
  %334 = vmatprep.mubr.f32.mxu0 0.0
  %335 = vmatmul.mubr.f32.gmra.mrb[0].mxu0 %v143
  %v336 = vpop.f32.mrb[0].mxu0
  %v337 = vadd.f32 0.0, %v336
  %v338 = vpop.f32.mrb[0].mxu0
  %339 = vmatprep.mubr.f32.mxu0 0.0
  %340 = vmatmul.mubr.f32.gmra.mrb[0].mxu0 %v146
  %v341 = vpop.f32.mrb[0].mxu0
  %v342 = vadd.f32 0.0, %v341
  %v343 = vpop.f32.mrb[0].mxu0
  %344 = vmatprep.mubr.f32.mxu0 0.0
  %345 = vmatmul.mubr.f32.gmra.mrb[0].mxu0 %v149
  %v346 = vpop.f32.mrb[0].mxu0
  %v347 = vadd.f32 0.0, %v346
  %v348 = vpop.f32.mrb[0].mxu0
  %349 = vmatprep.mubr.f32.mxu0 0.0
  %350 = vmatmul.mubr.f32.gmra.mrb[0].mxu0 %v152
  %v351 = vpop.f32.mrb[0].mxu0
  %v352 = vadd.f32 0.0, %v351
  %v353 = vpop.f32.mrb[0].mxu0
  %354 = vmatprep.mubr.f32.mxu0 0.0
  %355 = vmatmul.mubr.f32.gmra.mrb[0].mxu0 %v155
  %v356 = vpop.f32.mrb[0].mxu0
  %v357 = vadd.f32 0.0, %v356
  %v358 = vpop.f32.mrb[0].mxu0
  %359 = vmatprep.mubr.f32.mxu0 0.0
  %360 = vmatmul.mubr.f32.gmra.mrb[0].mxu0 %v158
  %v361 = vpop.f32.mrb[0].mxu0
  %v362 = vadd.f32 0.0, %v361
  %v363 = vpop.f32.mrb[0].mxu0
  %364 = vmatprep.mubr.f32.mxu0 0.0
  %365 = vmatmul.mubr.f32.gmra.mrb[0].mxu0 %v161
  %v366 = vpop.f32.mrb[0].mxu0
  %v367 = vadd.f32 0.0, %v366
  %v368 = vpop.f32.mrb[0].mxu0
  %369 = vmatprep.mubr.f32.mxu0 0.0
  %370 = vmatmul.mubr.f32.gmra.mrb[0].mxu0 %v164
  %v371 = vpop.f32.mrb[0].mxu0
  %v372 = vadd.f32 0.0, %v371
  %v373 = vpop.f32.mrb[0].mxu0
  %374 = vmatprep.mubr.f32.mxu0 0.0
  %375 = vmatmul.mubr.f32.gmra.mrb[0].mxu0 %v167
  %v376 = vpop.f32.mrb[0].mxu0
  %v377 = vadd.f32 0.0, %v376
  %v378 = vpop.f32.mrb[0].mxu0
  %379 = vmatprep.mubr.f32.mxu0 0.0
  %380 = vmatmul.mubr.f32.gmra.mrb[0].mxu0 %v170
  %v381 = vpop.f32.mrb[0].mxu0
  %v382 = vadd.f32 0.0, %v381
  %v383 = vpop.f32.mrb[0].mxu0
  %384 = vmatprep.mubr.f32.mxu0 0.0
  %385 = vmatmul.mubr.f32.gmra.mrb[0].mxu0 %v173
  %v386 = vpop.f32.mrb[0].mxu0
  %v387 = vadd.f32 0.0, %v386
  %v388 = vpop.f32.mrb[0].mxu0
  %389 = vmatprep.mubr.f32.mxu0 0.0
  %390 = vmatmul.mubr.f32.gmra.mrb[0].mxu0 %v176
  %v391 = vpop.f32.mrb[0].mxu0
  %v392 = vadd.f32 0.0, %v391
  %v393 = vpop.f32.mrb[0].mxu0
  %394 = vmatprep.mubr.f32.mxu0 0.0
  %395 = vmatmul.mubr.f32.gmra.mrb[0].mxu0 %v179
  %v396 = vpop.f32.mrb[0].mxu0
  %v397 = vadd.f32 0.0, %v396
  %v398 = vpop.f32.mrb[0].mxu0
  %399 = vmatprep.mubr.f32.mxu0 0.0
  %400 = vmatmul.mubr.f32.gmra.mrb[0].mxu0 %v182
  %v401 = vpop.f32.mrb[0].mxu0
  %v402 = vadd.f32 0.0, %v401
  %v403 = vpop.f32.mrb[0].mxu0
  %404 = vmatprep.mubr.f32.mxu0 0.0
  %405 = vmatmul.mubr.f32.gmra.mrb[0].mxu0 %v185
  %v406 = vpop.f32.mrb[0].mxu0
  %v407 = vadd.f32 0.0, %v406
  %v408 = vpop.f32.mrb[0].mxu0
  %409 = vmatprep.mubr.f32.mxu0 0.0
  %410 = vmatmul.mubr.f32.gmra.mrb[0].mxu0 %v188
  %v411 = vpop.f32.mrb[0].mxu0
  %v412 = vadd.f32 0.0, %v411
  %v413 = vpop.f32.mrb[0].mxu0
  %414 = vmatprep.mubr.f32.mxu0 0.0
  %415 = vmatmul.mubr.f32.gmra.mrb[0].mxu0 %v191
  %v416 = vpop.f32.mrb[0].mxu0
  %v417 = vadd.f32 0.0, %v416
  %v418 = vpop.f32.mrb[0].mxu0
  %419 = vmatprep.mubr.f32.mxu0 0.0
  %420 = vmatmul.mubr.f32.gmra.mrb[0].mxu0 %v194
  %v421 = vpop.f32.mrb[0].mxu0
  %v422 = vadd.f32 0.0, %v421
  %v423 = vpop.f32.mrb[0].mxu0
  %424 = vdwg.mxu0
  %v426 = vsel %vm99, %v64, 0
  %v429 = vsel %vm196, %v96, 0
  %431 = vmatprep.subr.mxu0 0.0
  %432 = vmatpush1.msra.mxu0 %v429
  %433 = vmatprep.subr.mxu0 0.0
  %434 = vmatpush1.msra.mxu0 0.0
  %435 = vmatprep.subr.mxu0 0.0
  %436 = vmatpush1.msra.mxu0 0.0
  %437 = vmatprep.subr.mxu0 0.0
  %438 = vmatpush1.msra.mxu0 0.0
  %439 = vmatprep.subr.mxu0 0.0
  %440 = vmatpush1.msra.mxu0 0.0
  %441 = vmatprep.subr.mxu0 0.0
  %442 = vmatpush1.msra.mxu0 0.0
  %443 = vmatprep.subr.mxu0 0.0
  %444 = vmatpush1.msra.mxu0 0.0
  %445 = vmatprep.subr.mxu0 0.0
  %446 = vmatpush1.msra.mxu0 0.0
  %447 = vmatprep.subr.mxu0 0.0
  %448 = vmatpush1.msra.mxu0 0.0
  %449 = vmatprep.subr.mxu0 0.0
  %450 = vmatpush1.msra.mxu0 0.0
  %451 = vmatprep.subr.mxu0 0.0
  %452 = vmatpush1.msra.mxu0 0.0
  %453 = vmatprep.subr.mxu0 0.0
  %454 = vmatpush1.msra.mxu0 0.0
  %455 = vmatprep.subr.mxu0 0.0
  %456 = vmatpush1.msra.mxu0 0.0
  %457 = vmatprep.subr.mxu0 0.0
  %458 = vmatpush1.msra.mxu0 0.0
  %459 = vmatprep.subr.mxu0 0.0
  %460 = vmatpush1.msra.mxu0 0.0
  %461 = vmatprep.subr.mxu0 0.0
  %462 = vmatpush1.msra.mxu0 0.0
  %463 = vmatprep.subr.mxu0 0.0
  %464 = vmatpush1.msra.mxu0 0.0
  %465 = vmatprep.subr.mxu0 0.0
  %466 = vmatpush1.msra.mxu0 0.0
  %467 = vmatprep.subr.mxu0 0.0
  %468 = vmatpush1.msra.mxu0 0.0
  %469 = vmatprep.subr.mxu0 0.0
  %470 = vmatpush1.msra.mxu0 0.0
  %471 = vmatprep.subr.mxu0 0.0
  %472 = vmatpush1.msra.mxu0 0.0
  %473 = vmatprep.subr.mxu0 0.0
  %474 = vmatpush1.msra.mxu0 0.0
  %475 = vmatprep.subr.mxu0 0.0
  %476 = vmatpush1.msra.mxu0 0.0
  %477 = vmatprep.subr.mxu0 0.0
  %478 = vmatpush1.msra.mxu0 0.0
  %479 = vmatprep.subr.mxu0 0.0
  %480 = vmatpush1.msra.mxu0 0.0
  %481 = vmatprep.subr.mxu0 0.0
  %482 = vmatpush1.msra.mxu0 0.0
  %483 = vmatprep.subr.mxu0 0.0
  %484 = vmatpush1.msra.mxu0 0.0
  %485 = vmatprep.subr.mxu0 0.0
  %486 = vmatpush1.msra.mxu0 0.0
  %487 = vmatprep.subr.mxu0 0.0
  %488 = vmatpush1.msra.mxu0 0.0
  %489 = vmatprep.subr.mxu0 0.0
  %490 = vmatpush1.msra.mxu0 0.0
  %491 = vmatprep.subr.mxu0 0.0
  %492 = vmatpush1.msra.mxu0 0.0
  %493 = vmatprep.subr.mxu0 0.0
  %494 = vmatpush1.msra.mxu0 0.0
  %495 = vmatprep.mubr.f32.mxu0 0.0
  %496 = vmatmul.mubr.f32.gmra.mrb[0].mxu0 %v426
  %v497 = vpop.f32.mrb[0].mxu0
  %v498 = vadd.f32 %v267, %v497
  %v499 = vpop.f32.mrb[0].mxu0
  %500 = vmatprep.mubr.f32.mxu0 0.0
  %501 = vmatmul.mubr.f32.gmra.mrb[0].mxu0 %v101
  %v502 = vpop.f32.mrb[0].mxu0
  %v503 = vadd.f32 %v272, %v502
  %v504 = vpop.f32.mrb[0].mxu0
  %505 = vmatprep.mubr.f32.mxu0 0.0
  %506 = vmatmul.mubr.f32.gmra.mrb[0].mxu0 %v104
  %v507 = vpop.f32.mrb[0].mxu0
  %v508 = vadd.f32 %v277, %v507
  %v509 = vpop.f32.mrb[0].mxu0
  %510 = vmatprep.mubr.f32.mxu0 0.0
  %511 = vmatmul.mubr.f32.gmra.mrb[0].mxu0 %v107
  %v512 = vpop.f32.mrb[0].mxu0
  %v513 = vadd.f32 %v282, %v512
  %v514 = vpop.f32.mrb[0].mxu0
  %515 = vmatprep.mubr.f32.mxu0 0.0
  %516 = vmatmul.mubr.f32.gmra.mrb[0].mxu0 %v110
  %v517 = vpop.f32.mrb[0].mxu0
  %v518 = vadd.f32 %v287, %v517
  %v519 = vpop.f32.mrb[0].mxu0
  %520 = vmatprep.mubr.f32.mxu0 0.0
  %521 = vmatmul.mubr.f32.gmra.mrb[0].mxu0 %v113
  %v522 = vpop.f32.mrb[0].mxu0
  %v523 = vadd.f32 %v292, %v522
  %v524 = vpop.f32.mrb[0].mxu0
  %525 = vmatprep.mubr.f32.mxu0 0.0
  %526 = vmatmul.mubr.f32.gmra.mrb[0].mxu0 %v116
  %v527 = vpop.f32.mrb[0].mxu0
  %v528 = vadd.f32 %v297, %v527
  %v529 = vpop.f32.mrb[0].mxu0
  %530 = vmatprep.mubr.f32.mxu0 0.0
  %531 = vmatmul.mubr.f32.gmra.mrb[0].mxu0 %v119
  %v532 = vpop.f32.mrb[0].mxu0
  %v533 = vadd.f32 %v302, %v532
  %v534 = vpop.f32.mrb[0].mxu0
  %535 = vmatprep.mubr.f32.mxu0 0.0
  %536 = vmatmul.mubr.f32.gmra.mrb[0].mxu0 %v122
  %v537 = vpop.f32.mrb[0].mxu0
  %v538 = vadd.f32 %v307, %v537
  %v539 = vpop.f32.mrb[0].mxu0
  %540 = vmatprep.mubr.f32.mxu0 0.0
  %541 = vmatmul.mubr.f32.gmra.mrb[0].mxu0 %v125
  %v542 = vpop.f32.mrb[0].mxu0
  %v543 = vadd.f32 %v312, %v542
  %v544 = vpop.f32.mrb[0].mxu0
  %545 = vmatprep.mubr.f32.mxu0 0.0
  %546 = vmatmul.mubr.f32.gmra.mrb[0].mxu0 %v128
  %v547 = vpop.f32.mrb[0].mxu0
  %v548 = vadd.f32 %v317, %v547
  %v549 = vpop.f32.mrb[0].mxu0
  %550 = vmatprep.mubr.f32.mxu0 0.0
  %551 = vmatmul.mubr.f32.gmra.mrb[0].mxu0 %v131
  %v552 = vpop.f32.mrb[0].mxu0
  %v553 = vadd.f32 %v322, %v552
  %v554 = vpop.f32.mrb[0].mxu0
  %555 = vmatprep.mubr.f32.mxu0 0.0
  %556 = vmatmul.mubr.f32.gmra.mrb[0].mxu0 %v134
  %v557 = vpop.f32.mrb[0].mxu0
  %v558 = vadd.f32 %v327, %v557
  %v559 = vpop.f32.mrb[0].mxu0
  %560 = vmatprep.mubr.f32.mxu0 0.0
  %561 = vmatmul.mubr.f32.gmra.mrb[0].mxu0 %v137
  %v562 = vpop.f32.mrb[0].mxu0
  %v563 = vadd.f32 %v332, %v562
  %v564 = vpop.f32.mrb[0].mxu0
  %565 = vmatprep.mubr.f32.mxu0 0.0
  %566 = vmatmul.mubr.f32.gmra.mrb[0].mxu0 %v140
  %v567 = vpop.f32.mrb[0].mxu0
  %v568 = vadd.f32 %v337, %v567
  %v569 = vpop.f32.mrb[0].mxu0
  %570 = vmatprep.mubr.f32.mxu0 0.0
  %571 = vmatmul.mubr.f32.gmra.mrb[0].mxu0 %v143
  %v572 = vpop.f32.mrb[0].mxu0
  %v573 = vadd.f32 %v342, %v572
  %v574 = vpop.f32.mrb[0].mxu0
  %575 = vmatprep.mubr.f32.mxu0 0.0
  %576 = vmatmul.mubr.f32.gmra.mrb[0].mxu0 %v146
  %v577 = vpop.f32.mrb[0].mxu0
  %v578 = vadd.f32 %v347, %v577
  %v579 = vpop.f32.mrb[0].mxu0
  %580 = vmatprep.mubr.f32.mxu0 0.0
  %581 = vmatmul.mubr.f32.gmra.mrb[0].mxu0 %v149
  %v582 = vpop.f32.mrb[0].mxu0
  %v583 = vadd.f32 %v352, %v582
  %v584 = vpop.f32.mrb[0].mxu0
  %585 = vmatprep.mubr.f32.mxu0 0.0
  %586 = vmatmul.mubr.f32.gmra.mrb[0].mxu0 %v152
  %v587 = vpop.f32.mrb[0].mxu0
  %v588 = vadd.f32 %v357, %v587
  %v589 = vpop.f32.mrb[0].mxu0
  %590 = vmatprep.mubr.f32.mxu0 0.0
  %591 = vmatmul.mubr.f32.gmra.mrb[0].mxu0 %v155
  %v592 = vpop.f32.mrb[0].mxu0
  %v593 = vadd.f32 %v362, %v592
  %v594 = vpop.f32.mrb[0].mxu0
  %595 = vmatprep.mubr.f32.mxu0 0.0
  %596 = vmatmul.mubr.f32.gmra.mrb[0].mxu0 %v158
  %v597 = vpop.f32.mrb[0].mxu0
  %v598 = vadd.f32 %v367, %v597
  %v599 = vpop.f32.mrb[0].mxu0
  %600 = vmatprep.mubr.f32.mxu0 0.0
  %601 = vmatmul.mubr.f32.gmra.mrb[0].mxu0 %v161
  %v602 = vpop.f32.mrb[0].mxu0
  %v603 = vadd.f32 %v372, %v602
  %v604 = vpop.f32.mrb[0].mxu0
  %605 = vmatprep.mubr.f32.mxu0 0.0
  %606 = vmatmul.mubr.f32.gmra.mrb[0].mxu0 %v164
  %v607 = vpop.f32.mrb[0].mxu0
  %v608 = vadd.f32 %v377, %v607
  %v609 = vpop.f32.mrb[0].mxu0
  %610 = vmatprep.mubr.f32.mxu0 0.0
  %611 = vmatmul.mubr.f32.gmra.mrb[0].mxu0 %v167
  %v612 = vpop.f32.mrb[0].mxu0
  %v613 = vadd.f32 %v382, %v612
  %v614 = vpop.f32.mrb[0].mxu0
  %615 = vmatprep.mubr.f32.mxu0 0.0
  %616 = vmatmul.mubr.f32.gmra.mrb[0].mxu0 %v170
  %v617 = vpop.f32.mrb[0].mxu0
  %v618 = vadd.f32 %v387, %v617
  %v619 = vpop.f32.mrb[0].mxu0
  %620 = vmatprep.mubr.f32.mxu0 0.0
  %621 = vmatmul.mubr.f32.gmra.mrb[0].mxu0 %v173
  %v622 = vpop.f32.mrb[0].mxu0
  %v623 = vadd.f32 %v392, %v622
  %v624 = vpop.f32.mrb[0].mxu0
  %625 = vmatprep.mubr.f32.mxu0 0.0
  %626 = vmatmul.mubr.f32.gmra.mrb[0].mxu0 %v176
  %v627 = vpop.f32.mrb[0].mxu0
  %v628 = vadd.f32 %v397, %v627
  %v629 = vpop.f32.mrb[0].mxu0
  %630 = vmatprep.mubr.f32.mxu0 0.0
  %631 = vmatmul.mubr.f32.gmra.mrb[0].mxu0 %v179
  %v632 = vpop.f32.mrb[0].mxu0
  %v633 = vadd.f32 %v402, %v632
  %v634 = vpop.f32.mrb[0].mxu0
  %635 = vmatprep.mubr.f32.mxu0 0.0
  %636 = vmatmul.mubr.f32.gmra.mrb[0].mxu0 %v182
  %v637 = vpop.f32.mrb[0].mxu0
  %v638 = vadd.f32 %v407, %v637
  %v639 = vpop.f32.mrb[0].mxu0
  %640 = vmatprep.mubr.f32.mxu0 0.0
  %641 = vmatmul.mubr.f32.gmra.mrb[0].mxu0 %v185
  %v642 = vpop.f32.mrb[0].mxu0
  %v643 = vadd.f32 %v412, %v642
  %v644 = vpop.f32.mrb[0].mxu0
  %645 = vmatprep.mubr.f32.mxu0 0.0
  %646 = vmatmul.mubr.f32.gmra.mrb[0].mxu0 %v188
  %v647 = vpop.f32.mrb[0].mxu0
  %v648 = vadd.f32 %v417, %v647
  %v649 = vpop.f32.mrb[0].mxu0
  %650 = vmatprep.mubr.f32.mxu0 0.0
  %651 = vmatmul.mubr.f32.gmra.mrb[0].mxu0 %v191
  %v652 = vpop.f32.mrb[0].mxu0
  %v653 = vadd.f32 %v422, %v652
  %v654 = vpop.f32.mrb[0].mxu0
  %655 = vdwg.mxu0
  %v657 = vlaneseq
  %v658 = vshrl.u32 %v657, 7
  %v659 = vsub.s32 0, %v658
  %v660 = vrot.slane %v98, %v659
  %v662 = vadd.f32 %v498, %v660
  %v663 = vadd.f32 %v503, %v660
  %v664 = vadd.f32 %v508, %v660
  %v665 = vadd.f32 %v513, %v660
  %v666 = vadd.f32 %v518, %v660
  %v667 = vadd.f32 %v523, %v660
  %v668 = vadd.f32 %v528, %v660
  %v669 = vadd.f32 %v533, %v660
  %v670 = vadd.f32 %v538, %v660
  %v671 = vadd.f32 %v543, %v660
  %v672 = vadd.f32 %v548, %v660
  %v673 = vadd.f32 %v553, %v660
  %v674 = vadd.f32 %v558, %v660
  %v675 = vadd.f32 %v563, %v660
  %v676 = vadd.f32 %v568, %v660
  %v677 = vadd.f32 %v573, %v660
  %v678 = vadd.f32 %v578, %v660
  %v679 = vadd.f32 %v583, %v660
  %v680 = vadd.f32 %v588, %v660
  %v681 = vadd.f32 %v593, %v660
  %v682 = vadd.f32 %v598, %v660
  %v683 = vadd.f32 %v603, %v660
  %v684 = vadd.f32 %v608, %v660
  %v685 = vadd.f32 %v613, %v660
  %v686 = vadd.f32 %v618, %v660
  %v687 = vadd.f32 %v623, %v660
  %v688 = vadd.f32 %v628, %v660
  %v689 = vadd.f32 %v633, %v660
  %v690 = vadd.f32 %v638, %v660
  %v691 = vadd.f32 %v643, %v660
  %v692 = vadd.f32 %v648, %v660
  %v693 = vadd.f32 %v653, %v660
  %v694 = vmax.f32 %v662, 0.0
  %v695 = vmax.f32 %v663, 0.0
  %v696 = vmax.f32 %v664, 0.0
  %v697 = vmax.f32 %v665, 0.0
  %v698 = vmax.f32 %v666, 0.0
  %v699 = vmax.f32 %v667, 0.0
  %v700 = vmax.f32 %v668, 0.0
  %v701 = vmax.f32 %v669, 0.0
  %v702 = vmax.f32 %v670, 0.0
  %v703 = vmax.f32 %v671, 0.0
  %v704 = vmax.f32 %v672, 0.0
  %v705 = vmax.f32 %v673, 0.0
  %v706 = vmax.f32 %v674, 0.0
  %v707 = vmax.f32 %v675, 0.0
  %v708 = vmax.f32 %v676, 0.0
  %v709 = vmax.f32 %v677, 0.0
  %v710 = vmax.f32 %v678, 0.0
  %v711 = vmax.f32 %v679, 0.0
  %v712 = vmax.f32 %v680, 0.0
  %v713 = vmax.f32 %v681, 0.0
  %v714 = vmax.f32 %v682, 0.0
  %v715 = vmax.f32 %v683, 0.0
  %v716 = vmax.f32 %v684, 0.0
  %v717 = vmax.f32 %v685, 0.0
  %v718 = vmax.f32 %v686, 0.0
  %v719 = vmax.f32 %v687, 0.0
  %v720 = vmax.f32 %v688, 0.0
  %v721 = vmax.f32 %v689, 0.0
  %v722 = vmax.f32 %v690, 0.0
  %v723 = vmax.f32 %v691, 0.0
  %v724 = vmax.f32 %v692, 0.0
  %v725 = vmax.f32 %v693, 0.0
  %v726 = vmax.f32 %v694, %v695
  %v727 = vmax.f32 %v696, %v697
  %v728 = vmax.f32 %v698, %v699
  %v729 = vmax.f32 %v700, %v701
  %v730 = vmax.f32 %v702, %v703
  %v731 = vmax.f32 %v704, %v705
  %v732 = vmax.f32 %v706, %v707
  %v733 = vmax.f32 %v708, %v709
  %v734 = vmax.f32 %v710, %v711
  %v735 = vmax.f32 %v712, %v713
  %v736 = vmax.f32 %v714, %v715
  %v737 = vmax.f32 %v716, %v717
  %v738 = vmax.f32 %v718, %v719
  %v739 = vmax.f32 %v720, %v721
  %v740 = vmax.f32 %v722, %v723
  %v741 = vmax.f32 %v724, %v725
  %v742 = vld [vmem:[%s4] sm:$0xff]
  %v743 = vld [vmem:[%s5] sm:$0xff]
  %v744 = vld [vmem:[%s6] sm:$0x1]
  %vm745 = vcmask 64512
  %v747 = vsel %vm745, %v727, 0
  %v750 = vsel %vm745, %v728, 0
  %v753 = vsel %vm745, %v729, 0
  %v756 = vsel %vm745, %v730, 0
  %v759 = vsel %vm745, %v731, 0
  %v762 = vsel %vm745, %v732, 0
  %v765 = vsel %vm745, %v733, 0
  %v768 = vsel %vm745, %v734, 0
  %v771 = vsel %vm745, %v735, 0
  %v774 = vsel %vm745, %v736, 0
  %v777 = vsel %vm745, %v737, 0
  %v780 = vsel %vm745, %v738, 0
  %v783 = vsel %vm745, %v739, 0
  %v786 = vsel %vm745, %v740, 0
  %v789 = vsel %vm745, %v741, 0
  %v791 = vsel %vm745, 0.0, 0
  %793 = vmatprep.subr.mxu0 0.0
  %794 = vmatpush1.msra.mxu0 %v743
  %795 = vmatprep.subr.mxu0 0.0
  %796 = vmatpush1.msra.mxu0 0.0
  %797 = vmatprep.subr.mxu0 0.0
  %798 = vmatpush1.msra.mxu0 0.0
  %799 = vmatprep.subr.mxu0 0.0
  %800 = vmatpush1.msra.mxu0 0.0
  %801 = vmatprep.subr.mxu0 0.0
  %802 = vmatpush1.msra.mxu0 0.0
  %803 = vmatprep.subr.mxu0 0.0
  %804 = vmatpush1.msra.mxu0 0.0
  %805 = vmatprep.subr.mxu0 0.0
  %806 = vmatpush1.msra.mxu0 0.0
  %807 = vmatprep.subr.mxu0 0.0
  %808 = vmatpush1.msra.mxu0 0.0
  %809 = vmatprep.subr.mxu0 0.0
  %810 = vmatpush1.msra.mxu0 0.0
  %811 = vmatprep.subr.mxu0 0.0
  %812 = vmatpush1.msra.mxu0 0.0
  %813 = vmatprep.subr.mxu0 0.0
  %814 = vmatpush1.msra.mxu0 0.0
  %815 = vmatprep.subr.mxu0 0.0
  %816 = vmatpush1.msra.mxu0 0.0
  %817 = vmatprep.subr.mxu0 0.0
  %818 = vmatpush1.msra.mxu0 0.0
  %819 = vmatprep.subr.mxu0 0.0
  %820 = vmatpush1.msra.mxu0 0.0
  %821 = vmatprep.subr.mxu0 0.0
  %822 = vmatpush1.msra.mxu0 0.0
  %823 = vmatprep.subr.mxu0 0.0
  %824 = vmatpush1.msra.mxu0 0.0
  %825 = vmatprep.subr.mxu0 0.0
  %826 = vmatpush1.msra.mxu0 0.0
  %827 = vmatprep.subr.mxu0 0.0
  %828 = vmatpush1.msra.mxu0 0.0
  %829 = vmatprep.subr.mxu0 0.0
  %830 = vmatpush1.msra.mxu0 0.0
  %831 = vmatprep.subr.mxu0 0.0
  %832 = vmatpush1.msra.mxu0 0.0
  %833 = vmatprep.subr.mxu0 0.0
  %834 = vmatpush1.msra.mxu0 0.0
  %835 = vmatprep.subr.mxu0 0.0
  %836 = vmatpush1.msra.mxu0 0.0
  %837 = vmatprep.subr.mxu0 0.0
  %838 = vmatpush1.msra.mxu0 0.0
  %839 = vmatprep.subr.mxu0 0.0
  %840 = vmatpush1.msra.mxu0 0.0
  %841 = vmatprep.subr.mxu0 0.0
  %842 = vmatpush1.msra.mxu0 0.0
  %843 = vmatprep.subr.mxu0 0.0
  %844 = vmatpush1.msra.mxu0 0.0
  %845 = vmatprep.subr.mxu0 0.0
  %846 = vmatpush1.msra.mxu0 0.0
  %847 = vmatprep.subr.mxu0 0.0
  %848 = vmatpush1.msra.mxu0 0.0
  %849 = vmatprep.subr.mxu0 0.0
  %850 = vmatpush1.msra.mxu0 0.0
  %851 = vmatprep.subr.mxu0 0.0
  %852 = vmatpush1.msra.mxu0 0.0
  %853 = vmatprep.subr.mxu0 0.0
  %854 = vmatpush1.msra.mxu0 0.0
  %855 = vmatprep.subr.mxu0 0.0
  %856 = vmatpush1.msra.mxu0 0.0
  %857 = vmatprep.mubr.f32.mxu0 0.0
  %858 = vmatmul.mubr.f32.gmra.mrb[0].mxu0 %v747
  %v859 = vpop.f32.mrb[0].mxu0
  %v860 = vadd.f32 0.0, %v859
  %v861 = vpop.f32.mrb[0].mxu0
  %862 = vmatprep.mubr.f32.mxu0 0.0
  %863 = vmatmul.mubr.f32.gmra.mrb[0].mxu0 %v750
  %v864 = vpop.f32.mrb[0].mxu0
  %v865 = vadd.f32 0.0, %v864
  %v866 = vpop.f32.mrb[0].mxu0
  %867 = vmatprep.mubr.f32.mxu0 0.0
  %868 = vmatmul.mubr.f32.gmra.mrb[0].mxu0 %v753
  %v869 = vpop.f32.mrb[0].mxu0
  %v870 = vadd.f32 0.0, %v869
  %v871 = vpop.f32.mrb[0].mxu0
  %872 = vmatprep.mubr.f32.mxu0 0.0
  %873 = vmatmul.mubr.f32.gmra.mrb[0].mxu0 %v756
  %v874 = vpop.f32.mrb[0].mxu0
  %v875 = vadd.f32 0.0, %v874
  %v876 = vpop.f32.mrb[0].mxu0
  %877 = vmatprep.mubr.f32.mxu0 0.0
  %878 = vmatmul.mubr.f32.gmra.mrb[0].mxu0 %v759
  %v879 = vpop.f32.mrb[0].mxu0
  %v880 = vadd.f32 0.0, %v879
  %v881 = vpop.f32.mrb[0].mxu0
  %882 = vmatprep.mubr.f32.mxu0 0.0
  %883 = vmatmul.mubr.f32.gmra.mrb[0].mxu0 %v762
  %v884 = vpop.f32.mrb[0].mxu0
  %v885 = vadd.f32 0.0, %v884
  %v886 = vpop.f32.mrb[0].mxu0
  %887 = vmatprep.mubr.f32.mxu0 0.0
  %888 = vmatmul.mubr.f32.gmra.mrb[0].mxu0 %v765
  %v889 = vpop.f32.mrb[0].mxu0
  %v890 = vadd.f32 0.0, %v889
  %v891 = vpop.f32.mrb[0].mxu0
  %892 = vmatprep.mubr.f32.mxu0 0.0
  %893 = vmatmul.mubr.f32.gmra.mrb[0].mxu0 %v768
  %v894 = vpop.f32.mrb[0].mxu0
  %v895 = vadd.f32 0.0, %v894
  %v896 = vpop.f32.mrb[0].mxu0
  %897 = vmatprep.mubr.f32.mxu0 0.0
  %898 = vmatmul.mubr.f32.gmra.mrb[0].mxu0 %v771
  %v899 = vpop.f32.mrb[0].mxu0
  %v900 = vadd.f32 0.0, %v899
  %v901 = vpop.f32.mrb[0].mxu0
  %902 = vmatprep.mubr.f32.mxu0 0.0
  %903 = vmatmul.mubr.f32.gmra.mrb[0].mxu0 %v774
  %v904 = vpop.f32.mrb[0].mxu0
  %v905 = vadd.f32 0.0, %v904
  %v906 = vpop.f32.mrb[0].mxu0
  %907 = vmatprep.mubr.f32.mxu0 0.0
  %908 = vmatmul.mubr.f32.gmra.mrb[0].mxu0 %v777
  %v909 = vpop.f32.mrb[0].mxu0
  %v910 = vadd.f32 0.0, %v909
  %v911 = vpop.f32.mrb[0].mxu0
  %912 = vmatprep.mubr.f32.mxu0 0.0
  %913 = vmatmul.mubr.f32.gmra.mrb[0].mxu0 %v780
  %v914 = vpop.f32.mrb[0].mxu0
  %v915 = vadd.f32 0.0, %v914
  %v916 = vpop.f32.mrb[0].mxu0
  %917 = vmatprep.mubr.f32.mxu0 0.0
  %918 = vmatmul.mubr.f32.gmra.mrb[0].mxu0 %v783
  %v919 = vpop.f32.mrb[0].mxu0
  %v920 = vadd.f32 0.0, %v919
  %v921 = vpop.f32.mrb[0].mxu0
  %922 = vmatprep.mubr.f32.mxu0 0.0
  %923 = vmatmul.mubr.f32.gmra.mrb[0].mxu0 %v786
  %v924 = vpop.f32.mrb[0].mxu0
  %v925 = vadd.f32 0.0, %v924
  %v926 = vpop.f32.mrb[0].mxu0
  %927 = vmatprep.mubr.f32.mxu0 0.0
  %928 = vmatmul.mubr.f32.gmra.mrb[0].mxu0 %v789
  %v929 = vpop.f32.mrb[0].mxu0
  %v930 = vadd.f32 0.0, %v929
  %v931 = vpop.f32.mrb[0].mxu0
  %932 = vmatprep.mubr.f32.mxu0 0.0
  %933 = vmatmul.mubr.f32.gmra.mrb[0].mxu0 %v791
  %v934 = vpop.f32.mrb[0].mxu0
  %v935 = vadd.f32 0.0, %v934
  %v936 = vpop.f32.mrb[0].mxu0
  %937 = vdwg.mxu0
  %v939 = vsel %vm745, %v726, 0
  %941 = vmatprep.subr.mxu0 0.0
  %942 = vmatpush1.msra.mxu0 %v742
  %943 = vmatprep.subr.mxu0 0.0
  %944 = vmatpush1.msra.mxu0 0.0
  %945 = vmatprep.subr.mxu0 0.0
  %946 = vmatpush1.msra.mxu0 0.0
  %947 = vmatprep.subr.mxu0 0.0
  %948 = vmatpush1.msra.mxu0 0.0
  %949 = vmatprep.subr.mxu0 0.0
  %950 = vmatpush1.msra.mxu0 0.0
  %951 = vmatprep.subr.mxu0 0.0
  %952 = vmatpush1.msra.mxu0 0.0
  %953 = vmatprep.subr.mxu0 0.0
  %954 = vmatpush1.msra.mxu0 0.0
  %955 = vmatprep.subr.mxu0 0.0
  %956 = vmatpush1.msra.mxu0 0.0
  %957 = vmatprep.subr.mxu0 0.0
  %958 = vmatpush1.msra.mxu0 0.0
  %959 = vmatprep.subr.mxu0 0.0
  %960 = vmatpush1.msra.mxu0 0.0
  %961 = vmatprep.subr.mxu0 0.0
  %962 = vmatpush1.msra.mxu0 0.0
  %963 = vmatprep.subr.mxu0 0.0
  %964 = vmatpush1.msra.mxu0 0.0
  %965 = vmatprep.subr.mxu0 0.0
  %966 = vmatpush1.msra.mxu0 0.0
  %967 = vmatprep.subr.mxu0 0.0
  %968 = vmatpush1.msra.mxu0 0.0
  %969 = vmatprep.subr.mxu0 0.0
  %970 = vmatpush1.msra.mxu0 0.0
  %971 = vmatprep.subr.mxu0 0.0
  %972 = vmatpush1.msra.mxu0 0.0
  %973 = vmatprep.subr.mxu0 0.0
  %974 = vmatpush1.msra.mxu0 0.0
  %975 = vmatprep.subr.mxu0 0.0
  %976 = vmatpush1.msra.mxu0 0.0
  %977 = vmatprep.subr.mxu0 0.0
  %978 = vmatpush1.msra.mxu0 0.0
  %979 = vmatprep.subr.mxu0 0.0
  %980 = vmatpush1.msra.mxu0 0.0
  %981 = vmatprep.subr.mxu0 0.0
  %982 = vmatpush1.msra.mxu0 0.0
  %983 = vmatprep.subr.mxu0 0.0
  %984 = vmatpush1.msra.mxu0 0.0
  %985 = vmatprep.subr.mxu0 0.0
  %986 = vmatpush1.msra.mxu0 0.0
  %987 = vmatprep.subr.mxu0 0.0
  %988 = vmatpush1.msra.mxu0 0.0
  %989 = vmatprep.subr.mxu0 0.0
  %990 = vmatpush1.msra.mxu0 0.0
  %991 = vmatprep.subr.mxu0 0.0
  %992 = vmatpush1.msra.mxu0 0.0
  %993 = vmatprep.subr.mxu0 0.0
  %994 = vmatpush1.msra.mxu0 0.0
  %995 = vmatprep.subr.mxu0 0.0
  %996 = vmatpush1.msra.mxu0 0.0
  %997 = vmatprep.subr.mxu0 0.0
  %998 = vmatpush1.msra.mxu0 0.0
  %999 = vmatprep.subr.mxu0 0.0
  %1000 = vmatpush1.msra.mxu0 0.0
  %1001 = vmatprep.subr.mxu0 0.0
  %1002 = vmatpush1.msra.mxu0 0.0
  %1003 = vmatprep.subr.mxu0 0.0
  %1004 = vmatpush1.msra.mxu0 0.0
  %1005 = vmatprep.mubr.f32.mxu0 0.0
  %1006 = vmatmul.mubr.f32.gmra.mrb[0].mxu0 %v939
  %v1007 = vpop.f32.mrb[0].mxu0
  %v1008 = vadd.f32 %v860, %v1007
  %v1009 = vpop.f32.mrb[0].mxu0
  %1010 = vmatprep.mubr.f32.mxu0 0.0
  %1011 = vmatmul.mubr.f32.gmra.mrb[0].mxu0 %v747
  %v1012 = vpop.f32.mrb[0].mxu0
  %v1013 = vadd.f32 %v865, %v1012
  %v1014 = vpop.f32.mrb[0].mxu0
  %1015 = vmatprep.mubr.f32.mxu0 0.0
  %1016 = vmatmul.mubr.f32.gmra.mrb[0].mxu0 %v750
  %v1017 = vpop.f32.mrb[0].mxu0
  %v1018 = vadd.f32 %v870, %v1017
  %v1019 = vpop.f32.mrb[0].mxu0
  %1020 = vmatprep.mubr.f32.mxu0 0.0
  %1021 = vmatmul.mubr.f32.gmra.mrb[0].mxu0 %v753
  %v1022 = vpop.f32.mrb[0].mxu0
  %v1023 = vadd.f32 %v875, %v1022
  %v1024 = vpop.f32.mrb[0].mxu0
  %1025 = vmatprep.mubr.f32.mxu0 0.0
  %1026 = vmatmul.mubr.f32.gmra.mrb[0].mxu0 %v756
  %v1027 = vpop.f32.mrb[0].mxu0
  %v1028 = vadd.f32 %v880, %v1027
  %v1029 = vpop.f32.mrb[0].mxu0
  %1030 = vmatprep.mubr.f32.mxu0 0.0
  %1031 = vmatmul.mubr.f32.gmra.mrb[0].mxu0 %v759
  %v1032 = vpop.f32.mrb[0].mxu0
  %v1033 = vadd.f32 %v885, %v1032
  %v1034 = vpop.f32.mrb[0].mxu0
  %1035 = vmatprep.mubr.f32.mxu0 0.0
  %1036 = vmatmul.mubr.f32.gmra.mrb[0].mxu0 %v762
  %v1037 = vpop.f32.mrb[0].mxu0
  %v1038 = vadd.f32 %v890, %v1037
  %v1039 = vpop.f32.mrb[0].mxu0
  %1040 = vmatprep.mubr.f32.mxu0 0.0
  %1041 = vmatmul.mubr.f32.gmra.mrb[0].mxu0 %v765
  %v1042 = vpop.f32.mrb[0].mxu0
  %v1043 = vadd.f32 %v895, %v1042
  %v1044 = vpop.f32.mrb[0].mxu0
  %1045 = vmatprep.mubr.f32.mxu0 0.0
  %1046 = vmatmul.mubr.f32.gmra.mrb[0].mxu0 %v768
  %v1047 = vpop.f32.mrb[0].mxu0
  %v1048 = vadd.f32 %v900, %v1047
  %v1049 = vpop.f32.mrb[0].mxu0
  %1050 = vmatprep.mubr.f32.mxu0 0.0
  %1051 = vmatmul.mubr.f32.gmra.mrb[0].mxu0 %v771
  %v1052 = vpop.f32.mrb[0].mxu0
  %v1053 = vadd.f32 %v905, %v1052
  %v1054 = vpop.f32.mrb[0].mxu0
  %1055 = vmatprep.mubr.f32.mxu0 0.0
  %1056 = vmatmul.mubr.f32.gmra.mrb[0].mxu0 %v774
  %v1057 = vpop.f32.mrb[0].mxu0
  %v1058 = vadd.f32 %v910, %v1057
  %v1059 = vpop.f32.mrb[0].mxu0
  %1060 = vmatprep.mubr.f32.mxu0 0.0
  %1061 = vmatmul.mubr.f32.gmra.mrb[0].mxu0 %v777
  %v1062 = vpop.f32.mrb[0].mxu0
  %v1063 = vadd.f32 %v915, %v1062
  %v1064 = vpop.f32.mrb[0].mxu0
  %1065 = vmatprep.mubr.f32.mxu0 0.0
  %1066 = vmatmul.mubr.f32.gmra.mrb[0].mxu0 %v780
  %v1067 = vpop.f32.mrb[0].mxu0
  %v1068 = vadd.f32 %v920, %v1067
  %v1069 = vpop.f32.mrb[0].mxu0
  %1070 = vmatprep.mubr.f32.mxu0 0.0
  %1071 = vmatmul.mubr.f32.gmra.mrb[0].mxu0 %v783
  %v1072 = vpop.f32.mrb[0].mxu0
  %v1073 = vadd.f32 %v925, %v1072
  %v1074 = vpop.f32.mrb[0].mxu0
  %1075 = vmatprep.mubr.f32.mxu0 0.0
  %1076 = vmatmul.mubr.f32.gmra.mrb[0].mxu0 %v786
  %v1077 = vpop.f32.mrb[0].mxu0
  %v1078 = vadd.f32 %v930, %v1077
  %v1079 = vpop.f32.mrb[0].mxu0
  %1080 = vmatprep.mubr.f32.mxu0 0.0
  %1081 = vmatmul.mubr.f32.gmra.mrb[0].mxu0 %v789
  %v1082 = vpop.f32.mrb[0].mxu0
  %v1083 = vadd.f32 %v935, %v1082
  %v1084 = vpop.f32.mrb[0].mxu0
  %1085 = vdwg.mxu0
  %v1087 = vlaneseq
  %v1088 = vshrl.u32 %v1087, 7
  %v1089 = vsub.s32 0, %v1088
  %v1090 = vrot.slane %v744, %v1089
  %v1092 = vadd.f32 %v1008, %v1090
  %v1093 = vadd.f32 %v1013, %v1090
  %v1094 = vadd.f32 %v1018, %v1090
  %v1095 = vadd.f32 %v1023, %v1090
  %v1096 = vadd.f32 %v1028, %v1090
  %v1097 = vadd.f32 %v1033, %v1090
  %v1098 = vadd.f32 %v1038, %v1090
  %v1099 = vadd.f32 %v1043, %v1090
  %v1100 = vadd.f32 %v1048, %v1090
  %v1101 = vadd.f32 %v1053, %v1090
  %v1102 = vadd.f32 %v1058, %v1090
  %v1103 = vadd.f32 %v1063, %v1090
  %v1104 = vadd.f32 %v1068, %v1090
  %v1105 = vadd.f32 %v1073, %v1090
  %v1106 = vadd.f32 %v1078, %v1090
  %v1107 = vadd.f32 %v1083, %v1090
  %v1108 = vmax.f32 %v1092, 0.0
  %v1109 = vmax.f32 %v1093, 0.0
  %v1110 = vmax.f32 %v1094, 0.0
  %v1111 = vmax.f32 %v1095, 0.0
  %v1112 = vmax.f32 %v1096, 0.0
  %v1113 = vmax.f32 %v1097, 0.0
  %v1114 = vmax.f32 %v1098, 0.0
  %v1115 = vmax.f32 %v1099, 0.0
  %v1116 = vmax.f32 %v1100, 0.0
  %v1117 = vmax.f32 %v1101, 0.0
  %v1118 = vmax.f32 %v1102, 0.0
  %v1119 = vmax.f32 %v1103, 0.0
  %v1120 = vmax.f32 %v1104, 0.0
  %v1121 = vmax.f32 %v1105, 0.0
  %v1122 = vmax.f32 %v1106, 0.0
  %v1123 = vmax.f32 %v1107, 0.0
  %v1124 = vmax.f32 %v1108, %v1109
  %v1125 = vmax.f32 %v1110, %v1111
  %v1126 = vmax.f32 %v1112, %v1113
  %v1127 = vmax.f32 %v1114, %v1115
  %v1128 = vmax.f32 %v1116, %v1117
  %v1129 = vmax.f32 %v1118, %v1119
  %v1130 = vmax.f32 %v1120, %v1121
  %v1131 = vmax.f32 %v1122, %v1123
  %v1132 = vld [vmem:[%s7] sm:$0xff]
  %v1133 = vld [vmem:[%s7 + $0x8] sm:$0xff]
  %v1134 = vld [vmem:[%s8] sm:$0xff]
  %v1135 = vld [vmem:[%s8 + $0x8] sm:$0xff]
  %v1136 = vld [vmem:[%s9] sm:$0x1]
  %vm1137 = vcmask 130048
  %v1139 = vsel %vm1137, %v1125, 0
  %v1142 = vsel %vm1137, %v1126, 0
  %v1145 = vsel %vm1137, %v1127, 0
  %v1148 = vsel %vm1137, %v1128, 0
  %v1151 = vsel %vm1137, %v1129, 0
  %v1154 = vsel %vm1137, %v1130, 0
  %v1157 = vsel %vm1137, %v1131, 0
  %v1159 = vsel %vm1137, 0.0, 0
  %1161 = vmatprep.subr.mxu0 0.0
  %1162 = vmatpush1.msra.mxu0 %v1134
  %1163 = vmatprep.subr.mxu0 0.0
  %1164 = vmatpush1.msra.mxu0 %v1135
  %1165 = vmatprep.subr.mxu0 0.0
  %1166 = vmatpush1.msra.mxu0 0.0
  %1167 = vmatprep.subr.mxu0 0.0
  %1168 = vmatpush1.msra.mxu0 0.0
  %1169 = vmatprep.subr.mxu0 0.0
  %1170 = vmatpush1.msra.mxu0 0.0
  %1171 = vmatprep.subr.mxu0 0.0
  %1172 = vmatpush1.msra.mxu0 0.0
  %1173 = vmatprep.subr.mxu0 0.0
  %1174 = vmatpush1.msra.mxu0 0.0
  %1175 = vmatprep.subr.mxu0 0.0
  %1176 = vmatpush1.msra.mxu0 0.0
  %1177 = vmatprep.subr.mxu0 0.0
  %1178 = vmatpush1.msra.mxu0 0.0
  %1179 = vmatprep.subr.mxu0 0.0
  %1180 = vmatpush1.msra.mxu0 0.0
  %1181 = vmatprep.subr.mxu0 0.0
  %1182 = vmatpush1.msra.mxu0 0.0
  %1183 = vmatprep.subr.mxu0 0.0
  %1184 = vmatpush1.msra.mxu0 0.0
  %1185 = vmatprep.subr.mxu0 0.0
  %1186 = vmatpush1.msra.mxu0 0.0
  %1187 = vmatprep.subr.mxu0 0.0
  %1188 = vmatpush1.msra.mxu0 0.0
  %1189 = vmatprep.subr.mxu0 0.0
  %1190 = vmatpush1.msra.mxu0 0.0
  %1191 = vmatprep.subr.mxu0 0.0
  %1192 = vmatpush1.msra.mxu0 0.0
  %1193 = vmatprep.subr.mxu0 0.0
  %1194 = vmatpush1.msra.mxu0 0.0
  %1195 = vmatprep.subr.mxu0 0.0
  %1196 = vmatpush1.msra.mxu0 0.0
  %1197 = vmatprep.subr.mxu0 0.0
  %1198 = vmatpush1.msra.mxu0 0.0
  %1199 = vmatprep.subr.mxu0 0.0
  %1200 = vmatpush1.msra.mxu0 0.0
  %1201 = vmatprep.subr.mxu0 0.0
  %1202 = vmatpush1.msra.mxu0 0.0
  %1203 = vmatprep.subr.mxu0 0.0
  %1204 = vmatpush1.msra.mxu0 0.0
  %1205 = vmatprep.subr.mxu0 0.0
  %1206 = vmatpush1.msra.mxu0 0.0
  %1207 = vmatprep.subr.mxu0 0.0
  %1208 = vmatpush1.msra.mxu0 0.0
  %1209 = vmatprep.subr.mxu0 0.0
  %1210 = vmatpush1.msra.mxu0 0.0
  %1211 = vmatprep.subr.mxu0 0.0
  %1212 = vmatpush1.msra.mxu0 0.0
  %1213 = vmatprep.subr.mxu0 0.0
  %1214 = vmatpush1.msra.mxu0 0.0
  %1215 = vmatprep.subr.mxu0 0.0
  %1216 = vmatpush1.msra.mxu0 0.0
  %1217 = vmatprep.subr.mxu0 0.0
  %1218 = vmatpush1.msra.mxu0 0.0
  %1219 = vmatprep.subr.mxu0 0.0
  %1220 = vmatpush1.msra.mxu0 0.0
  %1221 = vmatprep.subr.mxu0 0.0
  %1222 = vmatpush1.msra.mxu0 0.0
  %1223 = vmatprep.subr.mxu0 0.0
  %1224 = vmatpush1.msra.mxu0 0.0
  %1225 = vmatprep.mubr.f32.mxu0 0.0
  %1226 = vmatmul.mubr.f32.gmra.mrb[0].mxu0 %v1139
  %v1227 = vpop.f32.mrb[0].mxu0
  %v1228 = vadd.f32 0.0, %v1227
  %v1229 = vpop.f32.mrb[0].mxu0
  %1230 = vmatprep.mubr.f32.mxu0 0.0
  %1231 = vmatmul.mubr.f32.gmra.mrb[0].mxu0 %v1142
  %v1232 = vpop.f32.mrb[0].mxu0
  %v1233 = vadd.f32 0.0, %v1232
  %v1234 = vpop.f32.mrb[0].mxu0
  %1235 = vmatprep.mubr.f32.mxu0 0.0
  %1236 = vmatmul.mubr.f32.gmra.mrb[0].mxu0 %v1145
  %v1237 = vpop.f32.mrb[0].mxu0
  %v1238 = vadd.f32 0.0, %v1237
  %v1239 = vpop.f32.mrb[0].mxu0
  %1240 = vmatprep.mubr.f32.mxu0 0.0
  %1241 = vmatmul.mubr.f32.gmra.mrb[0].mxu0 %v1148
  %v1242 = vpop.f32.mrb[0].mxu0
  %v1243 = vadd.f32 0.0, %v1242
  %v1244 = vpop.f32.mrb[0].mxu0
  %1245 = vmatprep.mubr.f32.mxu0 0.0
  %1246 = vmatmul.mubr.f32.gmra.mrb[0].mxu0 %v1151
  %v1247 = vpop.f32.mrb[0].mxu0
  %v1248 = vadd.f32 0.0, %v1247
  %v1249 = vpop.f32.mrb[0].mxu0
  %1250 = vmatprep.mubr.f32.mxu0 0.0
  %1251 = vmatmul.mubr.f32.gmra.mrb[0].mxu0 %v1154
  %v1252 = vpop.f32.mrb[0].mxu0
  %v1253 = vadd.f32 0.0, %v1252
  %v1254 = vpop.f32.mrb[0].mxu0
  %1255 = vmatprep.mubr.f32.mxu0 0.0
  %1256 = vmatmul.mubr.f32.gmra.mrb[0].mxu0 %v1157
  %v1257 = vpop.f32.mrb[0].mxu0
  %v1258 = vadd.f32 0.0, %v1257
  %v1259 = vpop.f32.mrb[0].mxu0
  %1260 = vmatprep.mubr.f32.mxu0 0.0
  %1261 = vmatmul.mubr.f32.gmra.mrb[0].mxu0 %v1159
  %v1262 = vpop.f32.mrb[0].mxu0
  %v1263 = vadd.f32 0.0, %v1262
  %v1264 = vpop.f32.mrb[0].mxu0
  %1265 = vdwg.mxu0
  %v1267 = vsel %vm1137, %v1124, 0
  %1269 = vmatprep.subr.mxu0 0.0
  %1270 = vmatpush1.msra.mxu0 %v1132
  %1271 = vmatprep.subr.mxu0 0.0
  %1272 = vmatpush1.msra.mxu0 %v1133
  %1273 = vmatprep.subr.mxu0 0.0
  %1274 = vmatpush1.msra.mxu0 0.0
  %1275 = vmatprep.subr.mxu0 0.0
  %1276 = vmatpush1.msra.mxu0 0.0
  %1277 = vmatprep.subr.mxu0 0.0
  %1278 = vmatpush1.msra.mxu0 0.0
  %1279 = vmatprep.subr.mxu0 0.0
  %1280 = vmatpush1.msra.mxu0 0.0
  %1281 = vmatprep.subr.mxu0 0.0
  %1282 = vmatpush1.msra.mxu0 0.0
  %1283 = vmatprep.subr.mxu0 0.0
  %1284 = vmatpush1.msra.mxu0 0.0
  %1285 = vmatprep.subr.mxu0 0.0
  %1286 = vmatpush1.msra.mxu0 0.0
  %1287 = vmatprep.subr.mxu0 0.0
  %1288 = vmatpush1.msra.mxu0 0.0
  %1289 = vmatprep.subr.mxu0 0.0
  %1290 = vmatpush1.msra.mxu0 0.0
  %1291 = vmatprep.subr.mxu0 0.0
  %1292 = vmatpush1.msra.mxu0 0.0
  %1293 = vmatprep.subr.mxu0 0.0
  %1294 = vmatpush1.msra.mxu0 0.0
  %1295 = vmatprep.subr.mxu0 0.0
  %1296 = vmatpush1.msra.mxu0 0.0
  %1297 = vmatprep.subr.mxu0 0.0
  %1298 = vmatpush1.msra.mxu0 0.0
  %1299 = vmatprep.subr.mxu0 0.0
  %1300 = vmatpush1.msra.mxu0 0.0
  %1301 = vmatprep.subr.mxu0 0.0
  %1302 = vmatpush1.msra.mxu0 0.0
  %1303 = vmatprep.subr.mxu0 0.0
  %1304 = vmatpush1.msra.mxu0 0.0
  %1305 = vmatprep.subr.mxu0 0.0
  %1306 = vmatpush1.msra.mxu0 0.0
  %1307 = vmatprep.subr.mxu0 0.0
  %1308 = vmatpush1.msra.mxu0 0.0
  %1309 = vmatprep.subr.mxu0 0.0
  %1310 = vmatpush1.msra.mxu0 0.0
  %1311 = vmatprep.subr.mxu0 0.0
  %1312 = vmatpush1.msra.mxu0 0.0
  %1313 = vmatprep.subr.mxu0 0.0
  %1314 = vmatpush1.msra.mxu0 0.0
  %1315 = vmatprep.subr.mxu0 0.0
  %1316 = vmatpush1.msra.mxu0 0.0
  %1317 = vmatprep.subr.mxu0 0.0
  %1318 = vmatpush1.msra.mxu0 0.0
  %1319 = vmatprep.subr.mxu0 0.0
  %1320 = vmatpush1.msra.mxu0 0.0
  %1321 = vmatprep.subr.mxu0 0.0
  %1322 = vmatpush1.msra.mxu0 0.0
  %1323 = vmatprep.subr.mxu0 0.0
  %1324 = vmatpush1.msra.mxu0 0.0
  %1325 = vmatprep.subr.mxu0 0.0
  %1326 = vmatpush1.msra.mxu0 0.0
  %1327 = vmatprep.subr.mxu0 0.0
  %1328 = vmatpush1.msra.mxu0 0.0
  %1329 = vmatprep.subr.mxu0 0.0
  %1330 = vmatpush1.msra.mxu0 0.0
  %1331 = vmatprep.subr.mxu0 0.0
  %1332 = vmatpush1.msra.mxu0 0.0
  %1333 = vmatprep.mubr.f32.mxu0 0.0
  %1334 = vmatmul.mubr.f32.gmra.mrb[0].mxu0 %v1267
  %v1335 = vpop.f32.mrb[0].mxu0
  %v1336 = vadd.f32 %v1228, %v1335
  %v1337 = vpop.f32.mrb[0].mxu0
  %1338 = vmatprep.mubr.f32.mxu0 0.0
  %1339 = vmatmul.mubr.f32.gmra.mrb[0].mxu0 %v1139
  %v1340 = vpop.f32.mrb[0].mxu0
  %v1341 = vadd.f32 %v1233, %v1340
  %v1342 = vpop.f32.mrb[0].mxu0
  %1343 = vmatprep.mubr.f32.mxu0 0.0
  %1344 = vmatmul.mubr.f32.gmra.mrb[0].mxu0 %v1142
  %v1345 = vpop.f32.mrb[0].mxu0
  %v1346 = vadd.f32 %v1238, %v1345
  %v1347 = vpop.f32.mrb[0].mxu0
  %1348 = vmatprep.mubr.f32.mxu0 0.0
  %1349 = vmatmul.mubr.f32.gmra.mrb[0].mxu0 %v1145
  %v1350 = vpop.f32.mrb[0].mxu0
  %v1351 = vadd.f32 %v1243, %v1350
  %v1352 = vpop.f32.mrb[0].mxu0
  %1353 = vmatprep.mubr.f32.mxu0 0.0
  %1354 = vmatmul.mubr.f32.gmra.mrb[0].mxu0 %v1148
  %v1355 = vpop.f32.mrb[0].mxu0
  %v1356 = vadd.f32 %v1248, %v1355
  %v1357 = vpop.f32.mrb[0].mxu0
  %1358 = vmatprep.mubr.f32.mxu0 0.0
  %1359 = vmatmul.mubr.f32.gmra.mrb[0].mxu0 %v1151
  %v1360 = vpop.f32.mrb[0].mxu0
  %v1361 = vadd.f32 %v1253, %v1360
  %v1362 = vpop.f32.mrb[0].mxu0
  %1363 = vmatprep.mubr.f32.mxu0 0.0
  %1364 = vmatmul.mubr.f32.gmra.mrb[0].mxu0 %v1154
  %v1365 = vpop.f32.mrb[0].mxu0
  %v1366 = vadd.f32 %v1258, %v1365
  %v1367 = vpop.f32.mrb[0].mxu0
  %1368 = vmatprep.mubr.f32.mxu0 0.0
  %1369 = vmatmul.mubr.f32.gmra.mrb[0].mxu0 %v1157
  %v1370 = vpop.f32.mrb[0].mxu0
  %v1371 = vadd.f32 %v1263, %v1370
  %v1372 = vpop.f32.mrb[0].mxu0
  %1373 = vdwg.mxu0
  %v1375 = vlaneseq
  %v1376 = vshrl.u32 %v1375, 7
  %v1377 = vsub.s32 0, %v1376
  %v1378 = vrot.slane %v1136, %v1377
  %v1380 = vadd.f32 %v1336, %v1378
  %v1381 = vadd.f32 %v1341, %v1378
  %v1382 = vadd.f32 %v1346, %v1378
  %v1383 = vadd.f32 %v1351, %v1378
  %v1384 = vadd.f32 %v1356, %v1378
  %v1385 = vadd.f32 %v1361, %v1378
  %v1386 = vadd.f32 %v1366, %v1378
  %v1387 = vadd.f32 %v1371, %v1378
  %v1388 = vmax.f32 %v1380, 0.0
  %v1389 = vmax.f32 %v1381, 0.0
  %v1390 = vmax.f32 %v1382, 0.0
  %v1391 = vmax.f32 %v1383, 0.0
  %v1392 = vmax.f32 %v1384, 0.0
  %v1393 = vmax.f32 %v1385, 0.0
  %v1394 = vmax.f32 %v1386, 0.0
  %v1395 = vmax.f32 %v1387, 0.0
  %v1396 = vmax.f32 %v1388, %v1389
  %v1397 = vmax.f32 %v1390, %v1391
  %v1398 = vmax.f32 %v1392, %v1393
  %v1399 = vmax.f32 %v1394, %v1395
  %v1400 = vld [vmem:[%s10] sm:$0xff]
  %v1401 = vld [vmem:[%s10 + $0x8] sm:$0xff]
  %v1402 = vld [vmem:[%s10 + $0x10] sm:$0xff]
  %v1403 = vld [vmem:[%s10 + $0x18] sm:$0xff]
  %v1404 = vld [vmem:[%s11] sm:$0xff]
  %v1405 = vld [vmem:[%s11 + $0x8] sm:$0xff]
  %v1406 = vld [vmem:[%s11 + $0x10] sm:$0xff]
  %v1407 = vld [vmem:[%s11 + $0x18] sm:$0xff]
  %v1408 = vld [vmem:[%s12] sm:$0x1]
  %vm1409 = vcmask 261120
  %v1411 = vsel %vm1409, %v1397, 0
  %v1414 = vsel %vm1409, %v1398, 0
  %v1417 = vsel %vm1409, %v1399, 0
  %v1419 = vsel %vm1409, 0.0, 0
  %1421 = vmatprep.subr.mxu0 0.0
  %1422 = vmatpush1.msra.mxu0 %v1404
  %1423 = vmatprep.subr.mxu0 0.0
  %1424 = vmatpush1.msra.mxu0 %v1405
  %1425 = vmatprep.subr.mxu0 0.0
  %1426 = vmatpush1.msra.mxu0 %v1406
  %1427 = vmatprep.subr.mxu0 0.0
  %1428 = vmatpush1.msra.mxu0 %v1407
  %1429 = vmatprep.subr.mxu0 0.0
  %1430 = vmatpush1.msra.mxu0 0.0
  %1431 = vmatprep.subr.mxu0 0.0
  %1432 = vmatpush1.msra.mxu0 0.0
  %1433 = vmatprep.subr.mxu0 0.0
  %1434 = vmatpush1.msra.mxu0 0.0
  %1435 = vmatprep.subr.mxu0 0.0
  %1436 = vmatpush1.msra.mxu0 0.0
  %1437 = vmatprep.subr.mxu0 0.0
  %1438 = vmatpush1.msra.mxu0 0.0
  %1439 = vmatprep.subr.mxu0 0.0
  %1440 = vmatpush1.msra.mxu0 0.0
  %1441 = vmatprep.subr.mxu0 0.0
  %1442 = vmatpush1.msra.mxu0 0.0
  %1443 = vmatprep.subr.mxu0 0.0
  %1444 = vmatpush1.msra.mxu0 0.0
  %1445 = vmatprep.subr.mxu0 0.0
  %1446 = vmatpush1.msra.mxu0 0.0
  %1447 = vmatprep.subr.mxu0 0.0
  %1448 = vmatpush1.msra.mxu0 0.0
  %1449 = vmatprep.subr.mxu0 0.0
  %1450 = vmatpush1.msra.mxu0 0.0
  %1451 = vmatprep.subr.mxu0 0.0
  %1452 = vmatpush1.msra.mxu0 0.0
  %1453 = vmatprep.subr.mxu0 0.0
  %1454 = vmatpush1.msra.mxu0 0.0
  %1455 = vmatprep.subr.mxu0 0.0
  %1456 = vmatpush1.msra.mxu0 0.0
  %1457 = vmatprep.subr.mxu0 0.0
  %1458 = vmatpush1.msra.mxu0 0.0
  %1459 = vmatprep.subr.mxu0 0.0
  %1460 = vmatpush1.msra.mxu0 0.0
  %1461 = vmatprep.subr.mxu0 0.0
  %1462 = vmatpush1.msra.mxu0 0.0
  %1463 = vmatprep.subr.mxu0 0.0
  %1464 = vmatpush1.msra.mxu0 0.0
  %1465 = vmatprep.subr.mxu0 0.0
  %1466 = vmatpush1.msra.mxu0 0.0
  %1467 = vmatprep.subr.mxu0 0.0
  %1468 = vmatpush1.msra.mxu0 0.0
  %1469 = vmatprep.subr.mxu0 0.0
  %1470 = vmatpush1.msra.mxu0 0.0
  %1471 = vmatprep.subr.mxu0 0.0
  %1472 = vmatpush1.msra.mxu0 0.0
  %1473 = vmatprep.subr.mxu0 0.0
  %1474 = vmatpush1.msra.mxu0 0.0
  %1475 = vmatprep.subr.mxu0 0.0
  %1476 = vmatpush1.msra.mxu0 0.0
  %1477 = vmatprep.subr.mxu0 0.0
  %1478 = vmatpush1.msra.mxu0 0.0
  %1479 = vmatprep.subr.mxu0 0.0
  %1480 = vmatpush1.msra.mxu0 0.0
  %1481 = vmatprep.subr.mxu0 0.0
  %1482 = vmatpush1.msra.mxu0 0.0
  %1483 = vmatprep.subr.mxu0 0.0
  %1484 = vmatpush1.msra.mxu0 0.0
  %1485 = vmatprep.mubr.f32.mxu0 0.0
  %1486 = vmatmul.mubr.f32.gmra.mrb[0].mxu0 %v1411
  %v1487 = vpop.f32.mrb[0].mxu0
  %v1488 = vadd.f32 0.0, %v1487
  %v1489 = vpop.f32.mrb[0].mxu0
  %1490 = vmatprep.mubr.f32.mxu0 0.0
  %1491 = vmatmul.mubr.f32.gmra.mrb[0].mxu0 %v1414
  %v1492 = vpop.f32.mrb[0].mxu0
  %v1493 = vadd.f32 0.0, %v1492
  %v1494 = vpop.f32.mrb[0].mxu0
  %1495 = vmatprep.mubr.f32.mxu0 0.0
  %1496 = vmatmul.mubr.f32.gmra.mrb[0].mxu0 %v1417
  %v1497 = vpop.f32.mrb[0].mxu0
  %v1498 = vadd.f32 0.0, %v1497
  %v1499 = vpop.f32.mrb[0].mxu0
  %1500 = vmatprep.mubr.f32.mxu0 0.0
  %1501 = vmatmul.mubr.f32.gmra.mrb[0].mxu0 %v1419
  %v1502 = vpop.f32.mrb[0].mxu0
  %v1503 = vadd.f32 0.0, %v1502
  %v1504 = vpop.f32.mrb[0].mxu0
  %1505 = vdwg.mxu0
  %v1507 = vsel %vm1409, %v1396, 0
  %1509 = vmatprep.subr.mxu0 0.0
  %1510 = vmatpush1.msra.mxu0 %v1400
  %1511 = vmatprep.subr.mxu0 0.0
  %1512 = vmatpush1.msra.mxu0 %v1401
  %1513 = vmatprep.subr.mxu0 0.0
  %1514 = vmatpush1.msra.mxu0 %v1402
  %1515 = vmatprep.subr.mxu0 0.0
  %1516 = vmatpush1.msra.mxu0 %v1403
  %1517 = vmatprep.subr.mxu0 0.0
  %1518 = vmatpush1.msra.mxu0 0.0
  %1519 = vmatprep.subr.mxu0 0.0
  %1520 = vmatpush1.msra.mxu0 0.0
  %1521 = vmatprep.subr.mxu0 0.0
  %1522 = vmatpush1.msra.mxu0 0.0
  %1523 = vmatprep.subr.mxu0 0.0
  %1524 = vmatpush1.msra.mxu0 0.0
  %1525 = vmatprep.subr.mxu0 0.0
  %1526 = vmatpush1.msra.mxu0 0.0
  %1527 = vmatprep.subr.mxu0 0.0
  %1528 = vmatpush1.msra.mxu0 0.0
  %1529 = vmatprep.subr.mxu0 0.0
  %1530 = vmatpush1.msra.mxu0 0.0
  %1531 = vmatprep.subr.mxu0 0.0
  %1532 = vmatpush1.msra.mxu0 0.0
  %1533 = vmatprep.subr.mxu0 0.0
  %1534 = vmatpush1.msra.mxu0 0.0
  %1535 = vmatprep.subr.mxu0 0.0
  %1536 = vmatpush1.msra.mxu0 0.0
  %1537 = vmatprep.subr.mxu0 0.0
  %1538 = vmatpush1.msra.mxu0 0.0
  %1539 = vmatprep.subr.mxu0 0.0
  %1540 = vmatpush1.msra.mxu0 0.0
  %1541 = vmatprep.subr.mxu0 0.0
  %1542 = vmatpush1.msra.mxu0 0.0
  %1543 = vmatprep.subr.mxu0 0.0
  %1544 = vmatpush1.msra.mxu0 0.0
  %1545 = vmatprep.subr.mxu0 0.0
  %1546 = vmatpush1.msra.mxu0 0.0
  %1547 = vmatprep.subr.mxu0 0.0
  %1548 = vmatpush1.msra.mxu0 0.0
  %1549 = vmatprep.subr.mxu0 0.0
  %1550 = vmatpush1.msra.mxu0 0.0
  %1551 = vmatprep.subr.mxu0 0.0
  %1552 = vmatpush1.msra.mxu0 0.0
  %1553 = vmatprep.subr.mxu0 0.0
  %1554 = vmatpush1.msra.mxu0 0.0
  %1555 = vmatprep.subr.mxu0 0.0
  %1556 = vmatpush1.msra.mxu0 0.0
  %1557 = vmatprep.subr.mxu0 0.0
  %1558 = vmatpush1.msra.mxu0 0.0
  %1559 = vmatprep.subr.mxu0 0.0
  %1560 = vmatpush1.msra.mxu0 0.0
  %1561 = vmatprep.subr.mxu0 0.0
  %1562 = vmatpush1.msra.mxu0 0.0
  %1563 = vmatprep.subr.mxu0 0.0
  %1564 = vmatpush1.msra.mxu0 0.0
  %1565 = vmatprep.subr.mxu0 0.0
  %1566 = vmatpush1.msra.mxu0 0.0
  %1567 = vmatprep.subr.mxu0 0.0
  %1568 = vmatpush1.msra.mxu0 0.0
  %1569 = vmatprep.subr.mxu0 0.0
  %1570 = vmatpush1.msra.mxu0 0.0
  %1571 = vmatprep.subr.mxu0 0.0
  %1572 = vmatpush1.msra.mxu0 0.0
  %1573 = vmatprep.mubr.f32.mxu0 0.0
  %1574 = vmatmul.mubr.f32.gmra.mrb[0].mxu0 %v1507
  %v1575 = vpop.f32.mrb[0].mxu0
  %v1576 = vadd.f32 %v1488, %v1575
  %v1577 = vpop.f32.mrb[0].mxu0
  %1578 = vmatprep.mubr.f32.mxu0 0.0
  %1579 = vmatmul.mubr.f32.gmra.mrb[0].mxu0 %v1411
  %v1580 = vpop.f32.mrb[0].mxu0
  %v1581 = vadd.f32 %v1493, %v1580
  %v1582 = vpop.f32.mrb[0].mxu0
  %1583 = vmatprep.mubr.f32.mxu0 0.0
  %1584 = vmatmul.mubr.f32.gmra.mrb[0].mxu0 %v1414
  %v1585 = vpop.f32.mrb[0].mxu0
  %v1586 = vadd.f32 %v1498, %v1585
  %v1587 = vpop.f32.mrb[0].mxu0
  %1588 = vmatprep.mubr.f32.mxu0 0.0
  %1589 = vmatmul.mubr.f32.gmra.mrb[0].mxu0 %v1417
  %v1590 = vpop.f32.mrb[0].mxu0
  %v1591 = vadd.f32 %v1503, %v1590
  %v1592 = vpop.f32.mrb[0].mxu0
  %1593 = vdwg.mxu0
  %v1595 = vlaneseq
  %v1596 = vshrl.u32 %v1595, 7
  %v1597 = vsub.s32 0, %v1596
  %v1598 = vrot.slane %v1408, %v1597
  %v1600 = vadd.f32 %v1576, %v1598
  %v1601 = vadd.f32 %v1581, %v1598
  %v1602 = vadd.f32 %v1586, %v1598
  %v1603 = vadd.f32 %v1591, %v1598
  %v1604 = vmax.f32 %v1600, %v1601
  %v1605 = vmax.f32 %v1602, %v1603
  %v1606 = vld [vmem:[%s14] sm:$0x3]
  %v1607 = vld [vmem:[%s13] sm:$0xff]
  %v1608 = vld [vmem:[%s13 + $0x8] sm:$0xff]
  %v1609 = vld [vmem:[%s13 + $0x10] sm:$0xff]
  %v1610 = vld [vmem:[%s13 + $0x18] sm:$0xff]
  %v1611 = vld [vmem:[%s13 + $0x20] sm:$0xff]
  %v1612 = vld [vmem:[%s13 + $0x28] sm:$0xff]
  %v1613 = vld [vmem:[%s13 + $0x30] sm:$0xff]
  %v1614 = vld [vmem:[%s13 + $0x38] sm:$0xff]
  %v1615 = vld [vmem:[%s13 + $0x40] sm:$0xff]
  %v1616 = vld [vmem:[%s13 + $0x48] sm:$0xff]
  %v1617 = vld [vmem:[%s13 + $0x50] sm:$0xff]
  %v1618 = vld [vmem:[%s13 + $0x58] sm:$0xff]
  %v1619 = vld [vmem:[%s13 + $0x60] sm:$0xff]
  %v1620 = vld [vmem:[%s13 + $0x68] sm:$0xff]
  %v1621 = vld [vmem:[%s13 + $0x70] sm:$0xff]
  %v1622 = vld [vmem:[%s13 + $0x78] sm:$0xff]
  %vm1623 = vcmask 523264
  %v1625 = vsel %vm1623, %v1604, 0
  %1627 = vmatprep.subr.mxu0 %v1608
  %1628 = vmatpush1.msra.mxu0 %v1607
  %1629 = vmatprep.subr.mxu0 %v1610
  %1630 = vmatpush1.msra.mxu0 %v1609
  %1631 = vmatprep.subr.mxu0 %v1612
  %1632 = vmatpush1.msra.mxu0 %v1611
  %1633 = vmatprep.subr.mxu0 %v1614
  %1634 = vmatpush1.msra.mxu0 %v1613
  %1635 = vmatprep.subr.mxu0 %v1616
  %1636 = vmatpush1.msra.mxu0 %v1615
  %1637 = vmatprep.subr.mxu0 %v1618
  %1638 = vmatpush1.msra.mxu0 %v1617
  %1639 = vmatprep.subr.mxu0 %v1620
  %1640 = vmatpush1.msra.mxu0 %v1619
  %1641 = vmatprep.subr.mxu0 %v1622
  %1642 = vmatpush1.msra.mxu0 %v1621
  %1643 = vmatprep.subr.mxu0 0.0
  %1644 = vmatpush1.msra.mxu0 0.0
  %1645 = vmatprep.subr.mxu0 0.0
  %1646 = vmatpush1.msra.mxu0 0.0
  %1647 = vmatprep.subr.mxu0 0.0
  %1648 = vmatpush1.msra.mxu0 0.0
  %1649 = vmatprep.subr.mxu0 0.0
  %1650 = vmatpush1.msra.mxu0 0.0
  %1651 = vmatprep.subr.mxu0 0.0
  %1652 = vmatpush1.msra.mxu0 0.0
  %1653 = vmatprep.subr.mxu0 0.0
  %1654 = vmatpush1.msra.mxu0 0.0
  %1655 = vmatprep.subr.mxu0 0.0
  %1656 = vmatpush1.msra.mxu0 0.0
  %1657 = vmatprep.subr.mxu0 0.0
  %1658 = vmatpush1.msra.mxu0 0.0
  %1659 = vmatprep.subr.mxu0 0.0
  %1660 = vmatpush1.msra.mxu0 0.0
  %1661 = vmatprep.subr.mxu0 0.0
  %1662 = vmatpush1.msra.mxu0 0.0
  %1663 = vmatprep.subr.mxu0 0.0
  %1664 = vmatpush1.msra.mxu0 0.0
  %1665 = vmatprep.subr.mxu0 0.0
  %1666 = vmatpush1.msra.mxu0 0.0
  %1667 = vmatprep.subr.mxu0 0.0
  %1668 = vmatpush1.msra.mxu0 0.0
  %1669 = vmatprep.subr.mxu0 0.0
  %1670 = vmatpush1.msra.mxu0 0.0
  %1671 = vmatprep.subr.mxu0 0.0
  %1672 = vmatpush1.msra.mxu0 0.0
  %1673 = vmatprep.subr.mxu0 0.0
  %1674 = vmatpush1.msra.mxu0 0.0
  %1675 = vmatprep.subr.mxu0 0.0
  %1676 = vmatpush1.msra.mxu0 0.0
  %1677 = vmatprep.subr.mxu0 0.0
  %1678 = vmatpush1.msra.mxu0 0.0
  %1679 = vmatprep.subr.mxu0 0.0
  %1680 = vmatpush1.msra.mxu0 0.0
  %1681 = vmatprep.subr.mxu0 0.0
  %1682 = vmatpush1.msra.mxu0 0.0
  %1683 = vmatprep.subr.mxu0 0.0
  %1684 = vmatpush1.msra.mxu0 0.0
  %1685 = vmatprep.subr.mxu0 0.0
  %1686 = vmatpush1.msra.mxu0 0.0
  %1687 = vmatprep.subr.mxu0 0.0
  %1688 = vmatpush1.msra.mxu0 0.0
  %1689 = vmatprep.subr.mxu0 0.0
  %1690 = vmatpush1.msra.mxu0 0.0
  %1691 = vmatprep.mubr.f32.mxu0 0.0
  %1692 = vmatmul.mubr.f32.gmra.mrb[0].mxu0 %v1625
  %v1693 = vpop.f32.mrb[0].mxu0
  %v1694 = vadd.f32 0.0, %v1693
  %v1695 = vpop.f32.mrb[0].mxu0
  %v1696 = vadd.f32 0.0, %v1695
  %1697 = vdwg.mxu0
  %v1699 = vlaneseq
  %v1700 = vshrl.u32 %v1699, 7
  %v1701 = vsub.s32 0, %v1700
  %v1702 = vrot.slane %v1606, %v1701
  %v1703 = vlaneseq
  %v1704 = vshrl.u32 %v1703, 7
  %v1705 = vsub.s32 1, %v1704
  %v1706 = vrot.slane %v1606, %v1705
  %v1709 = vadd.f32 %v1702, %v1694
  %v1710 = vadd.f32 %v1706, %v1696
  %s1711 = scalar_lea.vmem %s13, 128
  %v1712 = vld [vmem:[%s1711] sm:$0xff]
  %v1713 = vld [vmem:[%s1711 + $0x8] sm:$0xff]
  %v1714 = vld [vmem:[%s1711 + $0x10] sm:$0xff]
  %v1715 = vld [vmem:[%s1711 + $0x18] sm:$0xff]
  %v1716 = vld [vmem:[%s1711 + $0x20] sm:$0xff]
  %v1717 = vld [vmem:[%s1711 + $0x28] sm:$0xff]
  %v1718 = vld [vmem:[%s1711 + $0x30] sm:$0xff]
  %v1719 = vld [vmem:[%s1711 + $0x38] sm:$0xff]
  %v1720 = vld [vmem:[%s1711 + $0x40] sm:$0xff]
  %v1721 = vld [vmem:[%s1711 + $0x48] sm:$0xff]
  %v1722 = vld [vmem:[%s1711 + $0x50] sm:$0xff]
  %v1723 = vld [vmem:[%s1711 + $0x58] sm:$0xff]
  %v1724 = vld [vmem:[%s1711 + $0x60] sm:$0xff]
  %v1725 = vld [vmem:[%s1711 + $0x68] sm:$0xff]
  %v1726 = vld [vmem:[%s1711 + $0x70] sm:$0xff]
  %v1727 = vld [vmem:[%s1711 + $0x78] sm:$0xff]
  %v1729 = vsel %vm1623, %v1605, 0
  %1731 = vmatprep.subr.mxu0 %v1713
  %1732 = vmatpush1.msra.mxu0 %v1712
  %1733 = vmatprep.subr.mxu0 %v1715
  %1734 = vmatpush1.msra.mxu0 %v1714
  %1735 = vmatprep.subr.mxu0 %v1717
  %1736 = vmatpush1.msra.mxu0 %v1716
  %1737 = vmatprep.subr.mxu0 %v1719
  %1738 = vmatpush1.msra.mxu0 %v1718
  %1739 = vmatprep.subr.mxu0 %v1721
  %1740 = vmatpush1.msra.mxu0 %v1720
  %1741 = vmatprep.subr.mxu0 %v1723
  %1742 = vmatpush1.msra.mxu0 %v1722
  %1743 = vmatprep.subr.mxu0 %v1725
  %1744 = vmatpush1.msra.mxu0 %v1724
  %1745 = vmatprep.subr.mxu0 %v1727
  %1746 = vmatpush1.msra.mxu0 %v1726
  %1747 = vmatprep.subr.mxu0 0.0
  %1748 = vmatpush1.msra.mxu0 0.0
  %1749 = vmatprep.subr.mxu0 0.0
  %1750 = vmatpush1.msra.mxu0 0.0
  %1751 = vmatprep.subr.mxu0 0.0
  %1752 = vmatpush1.msra.mxu0 0.0
  %1753 = vmatprep.subr.mxu0 0.0
  %1754 = vmatpush1.msra.mxu0 0.0
  %1755 = vmatprep.subr.mxu0 0.0
  %1756 = vmatpush1.msra.mxu0 0.0
  %1757 = vmatprep.subr.mxu0 0.0
  %1758 = vmatpush1.msra.mxu0 0.0
  %1759 = vmatprep.subr.mxu0 0.0
  %1760 = vmatpush1.msra.mxu0 0.0
  %1761 = vmatprep.subr.mxu0 0.0
  %1762 = vmatpush1.msra.mxu0 0.0
  %1763 = vmatprep.subr.mxu0 0.0
  %1764 = vmatpush1.msra.mxu0 0.0
  %1765 = vmatprep.subr.mxu0 0.0
  %1766 = vmatpush1.msra.mxu0 0.0
  %1767 = vmatprep.subr.mxu0 0.0
  %1768 = vmatpush1.msra.mxu0 0.0
  %1769 = vmatprep.subr.mxu0 0.0
  %1770 = vmatpush1.msra.mxu0 0.0
  %1771 = vmatprep.subr.mxu0 0.0
  %1772 = vmatpush1.msra.mxu0 0.0
  %1773 = vmatprep.subr.mxu0 0.0
  %1774 = vmatpush1.msra.mxu0 0.0
  %1775 = vmatprep.subr.mxu0 0.0
  %1776 = vmatpush1.msra.mxu0 0.0
  %1777 = vmatprep.subr.mxu0 0.0
  %1778 = vmatpush1.msra.mxu0 0.0
  %1779 = vmatprep.subr.mxu0 0.0
  %1780 = vmatpush1.msra.mxu0 0.0
  %1781 = vmatprep.subr.mxu0 0.0
  %1782 = vmatpush1.msra.mxu0 0.0
  %1783 = vmatprep.subr.mxu0 0.0
  %1784 = vmatpush1.msra.mxu0 0.0
  %1785 = vmatprep.subr.mxu0 0.0
  %1786 = vmatpush1.msra.mxu0 0.0
  %1787 = vmatprep.subr.mxu0 0.0
  %1788 = vmatpush1.msra.mxu0 0.0
  %1789 = vmatprep.subr.mxu0 0.0
  %1790 = vmatpush1.msra.mxu0 0.0
  %1791 = vmatprep.subr.mxu0 0.0
  %1792 = vmatpush1.msra.mxu0 0.0
  %1793 = vmatprep.subr.mxu0 0.0
  %1794 = vmatpush1.msra.mxu0 0.0
  %1795 = vmatprep.mubr.f32.mxu0 0.0
  %1796 = vmatmul.mubr.f32.gmra.mrb[0].mxu0 %v1729
  %v1797 = vpop.f32.mrb[0].mxu0
  %v1798 = vadd.f32 0.0, %v1797
  %v1799 = vpop.f32.mrb[0].mxu0
  %v1800 = vadd.f32 0.0, %v1799
  %1801 = vdwg.mxu0
  %v1802 = vadd.f32 %v1709, %v1798
  %v1803 = vadd.f32 %v1710, %v1800
  %v1804 = vld [vmem:[%s15] sm:$0xff]
  %v1805 = vld [vmem:[%s15 + $0x8] sm:$0xff]
  %v1806 = vld [vmem:[%s15 + $0x10] sm:$0xff]
  %v1807 = vld [vmem:[%s15 + $0x18] sm:$0xff]
  %v1808 = vld [vmem:[%s15 + $0x20] sm:$0xff]
  %v1809 = vld [vmem:[%s15 + $0x28] sm:$0xff]
  %v1810 = vld [vmem:[%s15 + $0x30] sm:$0xff]
  %v1811 = vld [vmem:[%s15 + $0x38] sm:$0xff]
  %v1812 = vld [vmem:[%s15 + $0x40] sm:$0xff]
  %v1813 = vld [vmem:[%s15 + $0x48] sm:$0xff]
  %v1814 = vld [vmem:[%s15 + $0x50] sm:$0xff]
  %v1815 = vld [vmem:[%s15 + $0x58] sm:$0xff]
  %v1816 = vld [vmem:[%s15 + $0x60] sm:$0xff]
  %v1817 = vld [vmem:[%s15 + $0x68] sm:$0xff]
  %v1818 = vld [vmem:[%s15 + $0x70] sm:$0xff]
  %v1819 = vld [vmem:[%s15 + $0x78] sm:$0xff]
  %v1820 = vld [vmem:[%s15 + $0x80] sm:$0xff]
  %v1821 = vld [vmem:[%s15 + $0x88] sm:$0xff]
  %v1822 = vld [vmem:[%s15 + $0x90] sm:$0xff]
  %v1823 = vld [vmem:[%s15 + $0x98] sm:$0xff]
  %v1824 = vld [vmem:[%s15 + $0xa0] sm:$0xff]
  %v1825 = vld [vmem:[%s15 + $0xa8] sm:$0xff]
  %v1826 = vld [vmem:[%s15 + $0xb0] sm:$0xff]
  %v1827 = vld [vmem:[%s15 + $0xb8] sm:$0xff]
  %v1828 = vld [vmem:[%s15 + $0xc0] sm:$0xff]
  %v1829 = vld [vmem:[%s15 + $0xc8] sm:$0xff]
  %v1830 = vld [vmem:[%s15 + $0xd0] sm:$0xff]
  %v1831 = vld [vmem:[%s15 + $0xd8] sm:$0xff]
  %v1832 = vld [vmem:[%s15 + $0xe0] sm:$0xff]
  %v1833 = vld [vmem:[%s15 + $0xe8] sm:$0xff]
  %v1834 = vld [vmem:[%s15 + $0xf0] sm:$0xff]
  %v1835 = vld [vmem:[%s15 + $0xf8] sm:$0xff]
  %v1836 = vld [vmem:[%s16] sm:$0x1]
  %v1838 = vlaneseq
  %v1839 = vshrl.u32 %v1838, 7
  %v1840 = vsub.s32 0, %v1839
  %v1841 = vrot.slane %v1836, %v1840
  %1843 = vmatprep.subr.mxu0 0.0
  %1844 = vmatpush1.msra.mxu0 %v1804
  %1845 = vmatprep.subr.mxu0 0.0
  %1846 = vmatpush1.msra.mxu0 %v1805
  %1847 = vmatprep.subr.mxu0 0.0
  %1848 = vmatpush1.msra.mxu0 %v1806
  %1849 = vmatprep.subr.mxu0 0.0
  %1850 = vmatpush1.msra.mxu0 %v1807
  %1851 = vmatprep.subr.mxu0 0.0
  %1852 = vmatpush1.msra.mxu0 %v1808
  %1853 = vmatprep.subr.mxu0 0.0
  %1854 = vmatpush1.msra.mxu0 %v1809
  %1855 = vmatprep.subr.mxu0 0.0
  %1856 = vmatpush1.msra.mxu0 %v1810
  %1857 = vmatprep.subr.mxu0 0.0
  %1858 = vmatpush1.msra.mxu0 %v1811
  %1859 = vmatprep.subr.mxu0 0.0
  %1860 = vmatpush1.msra.mxu0 %v1812
  %1861 = vmatprep.subr.mxu0 0.0
  %1862 = vmatpush1.msra.mxu0 %v1813
  %1863 = vmatprep.subr.mxu0 0.0
  %1864 = vmatpush1.msra.mxu0 %v1814
  %1865 = vmatprep.subr.mxu0 0.0
  %1866 = vmatpush1.msra.mxu0 %v1815
  %1867 = vmatprep.subr.mxu0 0.0
  %1868 = vmatpush1.msra.mxu0 %v1816
  %1869 = vmatprep.subr.mxu0 0.0
  %1870 = vmatpush1.msra.mxu0 %v1817
  %1871 = vmatprep.subr.mxu0 0.0
  %1872 = vmatpush1.msra.mxu0 %v1818
  %1873 = vmatprep.subr.mxu0 0.0
  %1874 = vmatpush1.msra.mxu0 %v1819
  %1875 = vmatprep.subr.mxu0 0.0
  %1876 = vmatpush1.msra.mxu0 %v1820
  %1877 = vmatprep.subr.mxu0 0.0
  %1878 = vmatpush1.msra.mxu0 %v1821
  %1879 = vmatprep.subr.mxu0 0.0
  %1880 = vmatpush1.msra.mxu0 %v1822
  %1881 = vmatprep.subr.mxu0 0.0
  %1882 = vmatpush1.msra.mxu0 %v1823
  %1883 = vmatprep.subr.mxu0 0.0
  %1884 = vmatpush1.msra.mxu0 %v1824
  %1885 = vmatprep.subr.mxu0 0.0
  %1886 = vmatpush1.msra.mxu0 %v1825
  %1887 = vmatprep.subr.mxu0 0.0
  %1888 = vmatpush1.msra.mxu0 %v1826
  %1889 = vmatprep.subr.mxu0 0.0
  %1890 = vmatpush1.msra.mxu0 %v1827
  %1891 = vmatprep.subr.mxu0 0.0
  %1892 = vmatpush1.msra.mxu0 %v1828
  %1893 = vmatprep.subr.mxu0 0.0
  %1894 = vmatpush1.msra.mxu0 %v1829
  %1895 = vmatprep.subr.mxu0 0.0
  %1896 = vmatpush1.msra.mxu0 %v1830
  %1897 = vmatprep.subr.mxu0 0.0
  %1898 = vmatpush1.msra.mxu0 %v1831
  %1899 = vmatprep.subr.mxu0 0.0
  %1900 = vmatpush1.msra.mxu0 %v1832
  %1901 = vmatprep.subr.mxu0 0.0
  %1902 = vmatpush1.msra.mxu0 %v1833
  %1903 = vmatprep.subr.mxu0 0.0
  %1904 = vmatpush1.msra.mxu0 %v1834
  %1905 = vmatprep.subr.mxu0 0.0
  %1906 = vmatpush1.msra.mxu0 %v1835
  %1907 = vmatprep.mubr.f32.mxu0 %v1803
  %1908 = vmatmul.mubr.f32.gmra.mrb[0].mxu0 %v1802
  %v1909 = vpop.f32.mrb[0].mxu0
  %v1910 = vadd.f32 %v1841, %v1909
  %v1911 = vpop.f32.mrb[0].mxu0
  %1912 = vdwg.mxu0
  %v1913 = vmax.f32 %v1910, 0.0
  %v1914 = vld [vmem:[%s17] sm:$0xff]
  %v1915 = vld [vmem:[%s17 + $0x8] sm:$0xff]
  %v1916 = vld [vmem:[%s17 + $0x10] sm:$0xff]
  %v1917 = vld [vmem:[%s17 + $0x18] sm:$0xff]
  %v1918 = vld [vmem:[#allocation2] sm:$0x1]
  %v1920 = vlaneseq
  %v1921 = vshrl.u32 %v1920, 7
  %v1922 = vsub.s32 0, %v1921
  %v1923 = vrot.slane %v1918, %v1922
  %v1926 = vsel %vm1409, %v1913, 0
  %1928 = vmatprep.subr.mxu0 0.0
  %1929 = vmatpush1.msra.mxu0 %v1914
  %1930 = vmatprep.subr.mxu0 0.0
  %1931 = vmatpush1.msra.mxu0 %v1915
  %1932 = vmatprep.subr.mxu0 0.0
  %1933 = vmatpush1.msra.mxu0 %v1916
  %1934 = vmatprep.subr.mxu0 0.0
  %1935 = vmatpush1.msra.mxu0 %v1917
  %1936 = vmatprep.subr.mxu0 0.0
  %1937 = vmatpush1.msra.mxu0 0.0
  %1938 = vmatprep.subr.mxu0 0.0
  %1939 = vmatpush1.msra.mxu0 0.0
  %1940 = vmatprep.subr.mxu0 0.0
  %1941 = vmatpush1.msra.mxu0 0.0
  %1942 = vmatprep.subr.mxu0 0.0
  %1943 = vmatpush1.msra.mxu0 0.0
  %1944 = vmatprep.subr.mxu0 0.0
  %1945 = vmatpush1.msra.mxu0 0.0
  %1946 = vmatprep.subr.mxu0 0.0
  %1947 = vmatpush1.msra.mxu0 0.0
  %1948 = vmatprep.subr.mxu0 0.0
  %1949 = vmatpush1.msra.mxu0 0.0
  %1950 = vmatprep.subr.mxu0 0.0
  %1951 = vmatpush1.msra.mxu0 0.0
  %1952 = vmatprep.subr.mxu0 0.0
  %1953 = vmatpush1.msra.mxu0 0.0
  %1954 = vmatprep.subr.mxu0 0.0
  %1955 = vmatpush1.msra.mxu0 0.0
  %1956 = vmatprep.subr.mxu0 0.0
  %1957 = vmatpush1.msra.mxu0 0.0
  %1958 = vmatprep.subr.mxu0 0.0
  %1959 = vmatpush1.msra.mxu0 0.0
  %1960 = vmatprep.subr.mxu0 0.0
  %1961 = vmatpush1.msra.mxu0 0.0
  %1962 = vmatprep.subr.mxu0 0.0
  %1963 = vmatpush1.msra.mxu0 0.0
  %1964 = vmatprep.subr.mxu0 0.0
  %1965 = vmatpush1.msra.mxu0 0.0
  %1966 = vmatprep.subr.mxu0 0.0
  %1967 = vmatpush1.msra.mxu0 0.0
  %1968 = vmatprep.subr.mxu0 0.0
  %1969 = vmatpush1.msra.mxu0 0.0
  %1970 = vmatprep.subr.mxu0 0.0
  %1971 = vmatpush1.msra.mxu0 0.0
  %1972 = vmatprep.subr.mxu0 0.0
  %1973 = vmatpush1.msra.mxu0 0.0
  %1974 = vmatprep.subr.mxu0 0.0
  %1975 = vmatpush1.msra.mxu0 0.0
  %1976 = vmatprep.subr.mxu0 0.0
  %1977 = vmatpush1.msra.mxu0 0.0
  %1978 = vmatprep.subr.mxu0 0.0
  %1979 = vmatpush1.msra.mxu0 0.0
  %1980 = vmatprep.subr.mxu0 0.0
  %1981 = vmatpush1.msra.mxu0 0.0
  %1982 = vmatprep.subr.mxu0 0.0
  %1983 = vmatpush1.msra.mxu0 0.0
  %1984 = vmatprep.subr.mxu0 0.0
  %1985 = vmatpush1.msra.mxu0 0.0
  %1986 = vmatprep.subr.mxu0 0.0
  %1987 = vmatpush1.msra.mxu0 0.0
  %1988 = vmatprep.subr.mxu0 0.0
  %1989 = vmatpush1.msra.mxu0 0.0
  %1990 = vmatprep.subr.mxu0 0.0
  %1991 = vmatpush1.msra.mxu0 0.0
  %1992 = vmatprep.mubr.f32.mxu0 0.0
  %1993 = vmatmul.mubr.f32.gmra.mrb[0].mxu0 %v1926
  %v1994 = vpop.f32.mrb[0].mxu0
  %v1995 = vadd.f32 %v1923, %v1994
  %v1996 = vpop.f32.mrb[0].mxu0
  %1997 = vdwg.mxu0
  %vm1998 = vcmask 7168
  %1999 = vst.msk [vmem:[%s19] sm:$0xff] %vm1998, %v1995
  // Predicated region
  $region78: #{tpu_custom_call.1} parent=0 // pred_check
    _
  $region79: #{tpu_custom_call.1} parent=0 // pred_check_branch
    %2001 = sbr.rel (0) target = $region81
  $region80: #{tpu_custom_call.1} parent=0 // pred_region
    _
  $region81: #{tpu_custom_call.1} parent=0 // pred_fallthru
    _
  // Predicated region
  $region82: #{tpu_custom_call.1} parent=0 // pred_check
    _
  $region83: #{tpu_custom_call.1} parent=0 // pred_check_branch
    %2003 = sbr.rel (0) target = $region85
  $region84: #{tpu_custom_call.1} parent=0 // pred_region
    _
  $region85: #{tpu_custom_call.1} parent=0 // pred_fallthru
    _

</llo_original>
